<compile_context>
chip_gen: v7x
topology: tpu7x:2x2x1
jax: 0.10.0
libtpu: 0.0.40
codegen_flags: <defaults>
</compile_context>

<pallas_src>
import functools
import math

import jax
import jax.numpy as jnp
import numpy as np
from jax.experimental import pallas as pl
from jax.experimental.pallas import tpu as pltpu

PACK = 8  # rows packed into the lane dimension per "super-row"


# ----------------------------------------------------------------------------
# Fused MLP kernel on packed tiles:
#   relu(relu(x@W1+b1)@W2+b2)@W3+b3 , all three layers in one kernel so the
#   hidden activations never leave VMEM.
# ----------------------------------------------------------------------------
def _mlp_kernel(x_ref, w1_ref, b1_ref, w2_ref, b2_ref, w3_ref, b3_ref, o_ref):
    # x_ref : (tile_s, PACK*Din)   f32  (cast to bf16 in-kernel)
    # w*_ref: block-diagonal packed weights, bf16
    # b*_ref: (1, PACK*Dh) / (1, PACK*Dout)  f32
    # o_ref : (tile_s, PACK*Dout)  f32
    x = x_ref[...].astype(jnp.bfloat16)

    h = jnp.dot(x, w1_ref[...], preferred_element_type=jnp.float32)
    h = jnp.maximum(h + b1_ref[...], 0.0)

    h = jnp.dot(h.astype(jnp.bfloat16), w2_ref[...],
                preferred_element_type=jnp.float32)
    h = jnp.maximum(h + b2_ref[...], 0.0)

    out = jnp.dot(h.astype(jnp.bfloat16), w3_ref[...],
                  preferred_element_type=jnp.float32)
    o_ref[...] = out + b3_ref[...]


def feature_predictor_forward(x, packed_params, *, max_tile_m=2048):
    """x: (..., input_dim) f32 -> (..., output_dim) f32."""
    (w1, b1), (w2, b2), (w3, b3) = packed_params
    din8, dh8 = w1.shape
    dout8 = w3.shape[1]
    din, dh, dout = din8 // PACK, dh8 // PACK, dout8 // PACK

    lead = x.shape[:-1]
    m = int(math.prod(lead)) if lead else 1
    x2 = x.reshape(m, din)

    # Pad rows only up to a multiple of PACK (usually a no-op).
    m8 = pl.cdiv(m, PACK) * PACK
    if m8 != m:
        x2 = jnp.pad(x2, ((0, m8 - m), (0, 0)))
    m_s = m8 // PACK
    # Free row-major reshape: 8 rows -> one lane-dense super-row.
    xp = x2.reshape(m_s, PACK * din)

    # Choose the super-row tile.  tile_m rows == tile_m // PACK super-rows.
    max_tile_s = max(8, max_tile_m // PACK)
    if m_s <= 8:
        tile_s = m_s                          # single full-extent block
    elif m_s <= 2 * max_tile_s:
        tile_s = pl.cdiv(m_s, 2 * 8) * 8      # exactly 2 steps (v7x: 2 TCs)
    else:
        tile_s = max_tile_s                   # large-M path, multiple of 8
    grid = (pl.cdiv(m_s, tile_s),)            # ragged last block handled by Pallas

    weight_bytes = (w1.size + w2.size + w3.size) * 2 + (b1.size + b2.size + b3.size) * 4
    cost = pl.CostEstimate(
        flops=2 * m8 * (din * dh + dh * dh + dh * dout),
        transcendentals=0,
        bytes_accessed=m8 * (din * 4 + dout * 4) + weight_bytes,
    )

    out = pl.pallas_call(
        _mlp_kernel,
        out_shape=jax.ShapeDtypeStruct((m_s, dout8), jnp.float32),
        grid=grid,
        in_specs=[
            pl.BlockSpec((tile_s, din8), lambda i: (i, 0)),
            pl.BlockSpec((din8, dh8), lambda i: (0, 0)),   # weights resident
            pl.BlockSpec((1, dh8), lambda i: (0, 0)),
            pl.BlockSpec((dh8, dh8), lambda i: (0, 0)),
            pl.BlockSpec((1, dh8), lambda i: (0, 0)),
            pl.BlockSpec((dh8, dout8), lambda i: (0, 0)),
            pl.BlockSpec((1, dout8), lambda i: (0, 0)),
        ],
        out_specs=pl.BlockSpec((tile_s, dout8), lambda i: (i, 0)),
        compiler_params=pltpu.CompilerParams(
            dimension_semantics=("parallel",),
        ),
        cost_estimate=cost,
    )(xp, w1, b1, w2, b2, w3, b3)

    out = out.reshape(m8, dout)               # free unpack (row-major)
    if m8 != m:
        out = out[:m]
    return out.reshape(*lead, dout)


# ----------------------------------------------------------------------------
# Parameter init (PyTorch nn.Linear default: uniform(+-1/sqrt(fan_in)))
# ----------------------------------------------------------------------------
# TODO(synk): weights are synthetic (no trained checkpoint); shapes/semantics
#             match nn.Linear defaults.
def init_params(key, input_dim, hidden_dim, output_dim):
    dims = [(input_dim, hidden_dim), (hidden_dim, hidden_dim),
            (hidden_dim, output_dim)]
    params = []
    for fan_in, fan_out in dims:
        key, kw, kb = jax.random.split(key, 3)
        bound = 1.0 / float(np.sqrt(fan_in))
        w = jax.random.uniform(kw, (fan_in, fan_out), jnp.float32, -bound, bound)
        b = jax.random.uniform(kb, (1, fan_out), jnp.float32, -bound, bound)
        params.append((w, b))
    return params


def pack_params(params, pack=PACK):
    """One-time host-side packing: W -> kron(I_pack, W) (block-diagonal, bf16),
    b -> tile(b, pack) (f32).  Matches the 8-rows-per-lane super-row layout."""
    eye = jnp.eye(pack, dtype=jnp.float32)
    packed = []
    for w, b in params:
        w_big = jnp.kron(eye, w).astype(jnp.bfloat16)
        b_big = jnp.tile(b, (1, pack)).astype(jnp.float32)
        packed.append((w_big, b_big))
    return packed


# ----------------------------------------------------------------------------
# Pure-JAX reference with the same mixed-precision policy
# (bf16 operands, f32 accumulation) — correctness check only.
# ----------------------------------------------------------------------------
def ref_forward(x, params):
    (w1, b1), (w2, b2), (w3, b3) = params
    lead = x.shape[:-1]
    h = x.reshape(-1, x.shape[-1]).astype(jnp.bfloat16)
    h = jnp.maximum(jnp.dot(h, w1.astype(jnp.bfloat16),
                            preferred_element_type=jnp.float32) + b1, 0.0)
    h = jnp.maximum(jnp.dot(h.astype(jnp.bfloat16), w2.astype(jnp.bfloat16),
                            preferred_element_type=jnp.float32) + b2, 0.0)
    out = jnp.dot(h.astype(jnp.bfloat16), w3.astype(jnp.bfloat16),
                  preferred_element_type=jnp.float32) + b3
    return out.reshape(*lead, w3.shape[1])


if __name__ == "__main__":
    key = jax.random.PRNGKey(0)
    kx, kx2, kp = jax.random.split(key, 3)

    batch, seq = 2, 8
    input_dim, hidden_dim, output_dim = 32, 64, 16

    params = init_params(kp, input_dim, hidden_dim, output_dim)
    packed_params = pack_params(params)
    fwd = jax.jit(feature_predictor_forward)

    # Small case: single full-extent block (m = 16 rows -> 2 super-rows).
    x = jax.random.normal(kx, (batch, seq, input_dim), jnp.float32)
    out = fwd(x, packed_params)
    jax.block_until_ready(out)
    assert out.shape == (batch, seq, output_dim)
    np.testing.assert_allclose(np.asarray(out), np.asarray(ref_forward(x, params)),
                               rtol=1e-2, atol=1e-2)

    # Larger row count: exercises the tiled, two-step parallel grid path.
    x_large = jax.random.normal(kx2, (2048, input_dim), jnp.float32)
    out_large = fwd(x_large, packed_params)
    jax.block_until_ready(out_large)
    assert out_large.shape == (2048, output_dim)
    np.testing.assert_allclose(np.asarray(out_large),
                               np.asarray(ref_forward(x_large, params)),
                               rtol=1e-2, atol=1e-2)

    print("KERNEL_OK")
</pallas_src>

<mosaic_0001>
module attributes {stable_mosaic.version = 11 : i64} {
  func.func @_mlp_kernel(%arg0: i32, %arg1: memref<2x256xf32, #tpu.memory_space<vmem>>, %arg2: memref<256x512xbf16, #tpu.memory_space<vmem>>, %arg3: memref<1x512xf32, #tpu.memory_space<vmem>>, %arg4: memref<512x512xbf16, #tpu.memory_space<vmem>>, %arg5: memref<1x512xf32, #tpu.memory_space<vmem>>, %arg6: memref<512x128xbf16, #tpu.memory_space<vmem>>, %arg7: memref<1x128xf32, #tpu.memory_space<vmem>>, %arg8: memref<2x128xf32, #tpu.memory_space<vmem>>) attributes {dimension_semantics = [#tpu.dimension_semantics<parallel>], iteration_bounds = array<i64: 1>, scalar_prefetch = 0 : i64, scratch_operands = 0 : i64, tpu.core_type = #tpu.core_type<tc>, window_params = [{transform_indices = @transform_0, window_bounds = array<i64: 2, 256>}, {pipeline_mode = #tpu.pipeline_mode<synchronous>, transform_indices = @transform_1, window_bounds = array<i64: 256, 512>}, {pipeline_mode = #tpu.pipeline_mode<synchronous>, transform_indices = @transform_2, window_bounds = array<i64: 1, 512>}, {pipeline_mode = #tpu.pipeline_mode<synchronous>, transform_indices = @transform_3, window_bounds = array<i64: 512, 512>}, {pipeline_mode = #tpu.pipeline_mode<synchronous>, transform_indices = @transform_4, window_bounds = array<i64: 1, 512>}, {pipeline_mode = #tpu.pipeline_mode<synchronous>, transform_indices = @transform_5, window_bounds = array<i64: 512, 128>}, {pipeline_mode = #tpu.pipeline_mode<synchronous>, transform_indices = @transform_6, window_bounds = array<i64: 1, 128>}, {transform_indices = @transform_7, window_bounds = array<i64: 2, 128>}]} {
    %c0 = arith.constant 0 : index
    %c0_0 = arith.constant 0 : index
    %0 = vector.load %arg1[%c0, %c0_0] : memref<2x256xf32, #tpu.memory_space<vmem>>, vector<2x256xf32>
    %1 = arith.truncf %0 : vector<2x256xf32> to vector<2x256xbf16>
    %c0_1 = arith.constant 0 : index
    %c0_2 = arith.constant 0 : index
    %2 = vector.load %arg2[%c0_1, %c0_2] : memref<256x512xbf16, #tpu.memory_space<vmem>>, vector<256x512xbf16>
    %cst = arith.constant dense<0.000000e+00> : vector<2x512xf32>
    %3 = tpu.matmul %1, %2, %cst {dimension_numbers = #tpu.dot_dimension_numbers<[1], [0], [0], [1], [0, 0, 1, 1], [], []>} : vector<2x256xbf16>, vector<256x512xbf16>, vector<2x512xf32> -> vector<2x512xf32>
    %c0_3 = arith.constant 0 : index
    %c0_4 = arith.constant 0 : index
    %4 = vector.load %arg3[%c0_3, %c0_4] : memref<1x512xf32, #tpu.memory_space<vmem>>, vector<1x512xf32>
    %5 = vector.broadcast %4 : vector<1x512xf32> to vector<2x512xf32>
    %6 = arith.addf %3, %5 : vector<2x512xf32>
    %cst_5 = arith.constant 0.000000e+00 : f32
    %7 = vector.broadcast %cst_5 : f32 to vector<2x512xf32>
    %8 = arith.maximumf %6, %7 : vector<2x512xf32>
    %9 = arith.truncf %8 : vector<2x512xf32> to vector<2x512xbf16>
    %c0_6 = arith.constant 0 : index
    %c0_7 = arith.constant 0 : index
    %10 = vector.load %arg4[%c0_6, %c0_7] : memref<512x512xbf16, #tpu.memory_space<vmem>>, vector<512x512xbf16>
    %cst_8 = arith.constant dense<0.000000e+00> : vector<2x512xf32>
    %11 = tpu.matmul %9, %10, %cst_8 {dimension_numbers = #tpu.dot_dimension_numbers<[1], [0], [0], [1], [0, 0, 1, 1], [], []>} : vector<2x512xbf16>, vector<512x512xbf16>, vector<2x512xf32> -> vector<2x512xf32>
    %c0_9 = arith.constant 0 : index
    %c0_10 = arith.constant 0 : index
    %12 = vector.load %arg5[%c0_9, %c0_10] : memref<1x512xf32, #tpu.memory_space<vmem>>, vector<1x512xf32>
    %13 = vector.broadcast %12 : vector<1x512xf32> to vector<2x512xf32>
    %14 = arith.addf %11, %13 : vector<2x512xf32>
    %cst_11 = arith.constant 0.000000e+00 : f32
    %15 = vector.broadcast %cst_11 : f32 to vector<2x512xf32>
    %16 = arith.maximumf %14, %15 : vector<2x512xf32>
    %17 = arith.truncf %16 : vector<2x512xf32> to vector<2x512xbf16>
    %c0_12 = arith.constant 0 : index
    %c0_13 = arith.constant 0 : index
    %18 = vector.load %arg6[%c0_12, %c0_13] : memref<512x128xbf16, #tpu.memory_space<vmem>>, vector<512x128xbf16>
    %cst_14 = arith.constant dense<0.000000e+00> : vector<2x128xf32>
    %19 = tpu.matmul %17, %18, %cst_14 {dimension_numbers = #tpu.dot_dimension_numbers<[1], [0], [0], [1], [0, 0, 1, 1], [], []>} : vector<2x512xbf16>, vector<512x128xbf16>, vector<2x128xf32> -> vector<2x128xf32>
    %c0_15 = arith.constant 0 : index
    %c0_16 = arith.constant 0 : index
    %20 = vector.load %arg7[%c0_15, %c0_16] : memref<1x128xf32, #tpu.memory_space<vmem>>, vector<1x128xf32>
    %21 = vector.broadcast %20 : vector<1x128xf32> to vector<2x128xf32>
    %22 = arith.addf %19, %21 : vector<2x128xf32>
    %c0_17 = arith.constant 0 : index
    %c0_18 = arith.constant 0 : index
    %23 = vector.load %arg8[%c0_17, %c0_18] : memref<2x128xf32, #tpu.memory_space<vmem>>, vector<2x128xf32>
    tpu.vector_store %arg8[%c0_17, %c0_18], %22 {strides = array<i32>} : memref<2x128xf32, #tpu.memory_space<vmem>>, vector<2x128xf32>,
    return
  }
  func.func @transform_0(%arg0: i32) -> (i32, i32) {
    %c0_i32 = arith.constant 0 : i32
    %c0_i32_0 = arith.constant 0 : i32
    return %arg0, %c0_i32 : i32, i32
  }
  func.func @transform_1(%arg0: i32) -> (i32, i32) {
    %c0_i32 = arith.constant 0 : i32
    %c0_i32_0 = arith.constant 0 : i32
    %c0_i32_1 = arith.constant 0 : i32
    return %c0_i32, %c0_i32_0 : i32, i32
  }
  func.func @transform_2(%arg0: i32) -> (i32, i32) {
    %c0_i32 = arith.constant 0 : i32
    %c0_i32_0 = arith.constant 0 : i32
    %c0_i32_1 = arith.constant 0 : i32
    return %c0_i32, %c0_i32_0 : i32, i32
  }
  func.func @transform_3(%arg0: i32) -> (i32, i32) {
    %c0_i32 = arith.constant 0 : i32
    %c0_i32_0 = arith.constant 0 : i32
    %c0_i32_1 = arith.constant 0 : i32
    return %c0_i32, %c0_i32_0 : i32, i32
  }
  func.func @transform_4(%arg0: i32) -> (i32, i32) {
    %c0_i32 = arith.constant 0 : i32
    %c0_i32_0 = arith.constant 0 : i32
    %c0_i32_1 = arith.constant 0 : i32
    return %c0_i32, %c0_i32_0 : i32, i32
  }
  func.func @transform_5(%arg0: i32) -> (i32, i32) {
    %c0_i32 = arith.constant 0 : i32
    %c0_i32_0 = arith.constant 0 : i32
    %c0_i32_1 = arith.constant 0 : i32
    return %c0_i32, %c0_i32_0 : i32, i32
  }
  func.func @transform_6(%arg0: i32) -> (i32, i32) {
    %c0_i32 = arith.constant 0 : i32
    %c0_i32_0 = arith.constant 0 : i32
    %c0_i32_1 = arith.constant 0 : i32
    return %c0_i32, %c0_i32_0 : i32, i32
  }
  func.func @transform_7(%arg0: i32) -> (i32, i32) {
    %c0_i32 = arith.constant 0 : i32
    %c0_i32_0 = arith.constant 0 : i32
    return %arg0, %c0_i32 : i32, i32
  }
}

</mosaic_0001>

<llo_original>
// kernel: feature_predictor_forward.1
$region0: #{feature_predictor_forward.1}
  #allocation0 [shape = 'u32[]', space=smem, size = 0x4, offset = 0x4, fixed_abs, tag = 'smem constant byte address 0x4 - core index']
  #allocation1 [shape = 'u32[144,128]{1,0:T(1,128)}', space=vmem, size = 0x12000, scoped, tag = 'internal scratch']
  %s0 = inlined_call_operand.vmem [shape: f32[2,256], index: 0, kind: input, shape index: {}]
  %s1 = inlined_call_operand.hbm [shape: bf16[256,512], index: 1, kind: input, shape index: {}]
  %s2 = inlined_call_operand.vmem [shape: f32[1,512], index: 2, kind: input, shape index: {}]
  %s3 = inlined_call_operand.hbm [shape: bf16[512,512], index: 3, kind: input, shape index: {}]
  %s4 = inlined_call_operand.vmem [shape: f32[1,512], index: 4, kind: input, shape index: {}]
  %s5 = inlined_call_operand.hbm [shape: bf16[512,128], index: 5, kind: input, shape index: {}]
  %s6 = inlined_call_operand.vmem [shape: f32[1,128], index: 6, kind: input, shape index: {}]
  %s7 = inlined_call_operand.vmem [shape: f32[2,128], index: 7, kind: output, shape index: {}]
  %s8 = sld [smem:[#allocation0]]
  $region50: #{feature_predictor_forward.1} parent=0
    _
  %s10 = ssub.s32 1, %s8
  %s11 = scalar_select 0, %s10, %s8
  $region1: #{feature_predictor_forward.1} parent=0
    #allocation2 [shape = 'u8[262144]{0}', space=vmem, size = 0x40000, scoped, tag = 'input window, operand 1, single buffered']
    #allocation3 [shape = 's32[1]{0}', space=sflag, size = 0x4, scoped, tag = 'scoped memory for feature_predictor_forward.1']
    #allocation4 [shape = 'u8[524288]{0}', space=vmem, size = 0x80000, scoped, tag = 'input window, operand 3, single buffered']
    #allocation5 [shape = 's32[1]{0}', space=sflag, size = 0x4, scoped, tag = 'scoped memory for feature_predictor_forward.1']
    #allocation6 [shape = 'u8[131072]{0}', space=vmem, size = 0x20000, scoped, tag = 'input window, operand 5, single buffered']
    %12 = vsyncpa [#allocation3], 0
    %13 = vsyncpa [#allocation5], 0
    // Predicated region
    $region2: #{feature_predictor_forward.1} parent=1 // pred_check
      _
    $region3: #{feature_predictor_forward.1} parent=1 // pred_check_branch
      %15 = sbr.rel (0) target = $region5
    $region4: #{feature_predictor_forward.1} parent=1 // pred_region
      _
    $region5: #{feature_predictor_forward.1} parent=1 // pred_fallthru
      _
    // Predicated region
    $region6: #{feature_predictor_forward.1} parent=1 // pred_check
      _
    $region7: #{feature_predictor_forward.1} parent=1 // pred_check_branch
      %17 = sbr.rel (0) target = $region9
    $region8: #{feature_predictor_forward.1} parent=1 // pred_region
      %s19 = ssub.s32 8192, 8192
      %20 = vsyncadd [#allocation3], %s19
      %s21 = sshll.u32 [#allocation2], 4
      %s22 = int_to_ptr.vmem [resolvable:$true] %s21
      %27 = dma.hbm_to_vmem [thread:$0]  %s1, 8192, %s22, [#allocation3], 256, 256, 16
    $region9: #{feature_predictor_forward.1} parent=1 // pred_fallthru
      _
    // Predicated region
    $region10: #{feature_predictor_forward.1} parent=1 // pred_check
      _
    $region11: #{feature_predictor_forward.1} parent=1 // pred_check_branch
      %29 = sbr.rel (0) target = $region13
    $region12: #{feature_predictor_forward.1} parent=1 // pred_region
      _
    $region13: #{feature_predictor_forward.1} parent=1 // pred_fallthru
      _
    // Predicated region
    $region14: #{feature_predictor_forward.1} parent=1 // pred_check
      _
    $region15: #{feature_predictor_forward.1} parent=1 // pred_check_branch
      %31 = sbr.rel (0) target = $region17
    $region16: #{feature_predictor_forward.1} parent=1 // pred_region
      %s33 = ssub.s32 16384, 16384
      %34 = vsyncadd [#allocation5], %s33
      %s35 = sshll.u32 [#allocation4], 4
      %s36 = int_to_ptr.vmem [resolvable:$true] %s35
      %41 = dma.hbm_to_vmem [thread:$0]  %s3, 16384, %s36, [#allocation5], 256, 256, 16
    $region17: #{feature_predictor_forward.1} parent=1 // pred_fallthru
      _
    // Predicated region
    $region18: #{feature_predictor_forward.1} parent=1 // pred_check
      _
    $region19: #{feature_predictor_forward.1} parent=1 // pred_check_branch
      %43 = sbr.rel (0) target = $region21
    $region20: #{feature_predictor_forward.1} parent=1 // pred_region
      _
    $region21: #{feature_predictor_forward.1} parent=1 // pred_fallthru
      _
    // Predicated region
    $region22: #{feature_predictor_forward.1} parent=1 // pred_check
      _
    $region23: #{feature_predictor_forward.1} parent=1 // pred_check_branch
      %45 = sbr.rel (0) target = $region25
    $region24: #{feature_predictor_forward.1} parent=1 // pred_region
      %s47 = ssub.s32 4096, 4096
      %48 = vsyncadd [#allocation5], %s47
      %s49 = sshll.u32 [#allocation6], 4
      %s50 = int_to_ptr.vmem [resolvable:$true] %s49
      %55 = dma.hbm_to_vmem [thread:$0]  %s5, 4096, %s50, [#allocation5], 64, 64, 4
    $region25: #{feature_predictor_forward.1} parent=1 // pred_fallthru
      _
    // Predicated region
    $region26: #{feature_predictor_forward.1} parent=1 // pred_check
      _
    $region27: #{feature_predictor_forward.1} parent=1 // pred_check_branch
      %57 = sbr.rel (0) target = $region29
    $region28: #{feature_predictor_forward.1} parent=1 // pred_region
      _
    $region29: #{feature_predictor_forward.1} parent=1 // pred_fallthru
      _
    // Predicated region
    $region30: #{feature_predictor_forward.1} parent=1 // pred_check
      _
    $region31: #{feature_predictor_forward.1} parent=1 // pred_check_branch
      %59 = sbr.rel (0) target = $region33
    $region32: #{feature_predictor_forward.1} parent=1 // pred_region
      %60 = dma.done [#allocation3], 8192
    $region33: #{feature_predictor_forward.1} parent=1 // pred_fallthru
      _
    // Predicated region
    $region34: #{feature_predictor_forward.1} parent=1 // pred_check
      _
    $region35: #{feature_predictor_forward.1} parent=1 // pred_check_branch
      %62 = sbr.rel (0) target = $region37
    $region36: #{feature_predictor_forward.1} parent=1 // pred_region
      %63 = dma.done [#allocation5], 16384
    $region37: #{feature_predictor_forward.1} parent=1 // pred_fallthru
      _
    // Predicated region
    $region38: #{feature_predictor_forward.1} parent=1 // pred_check
      _
    $region39: #{feature_predictor_forward.1} parent=1 // pred_check_branch
      %65 = sbr.rel (0) target = $region41
    $region40: #{feature_predictor_forward.1} parent=1 // pred_region
      %66 = dma.done [#allocation5], 4096
    $region41: #{feature_predictor_forward.1} parent=1 // pred_fallthru
      _
    %v68 = vld [vmem:[%s0] sm:$0xf]
    %v71 = vunpack.c.l.s4 1983009808
    %v72 = vunpack.c.0.s8 %v71
    %v73 = vlaneseq
    %v74 = vshrl.u32 %v73, 7
    %v75 = vsub.s32 %v72, %v74
    %v76 = vrot.slane %v68, %v75
    %v77 = vcombine.high %v76, %v76
    %v80 = vpack.c.bf16 %v76, %v76
    %v81 = vpack.c.bf16 %v77, %v77
    %v82 = vld [vmem:[#allocation2] sm:$0xff]
    %v83 = vld [vmem:[#allocation2 + $0x8] sm:$0xff]
    %v84 = vld [vmem:[#allocation2 + $0x10] sm:$0xff]
    %v85 = vld [vmem:[#allocation2 + $0x18] sm:$0xff]
    %v86 = vld [vmem:[#allocation2 + $0x20] sm:$0xff]
    %v87 = vld [vmem:[#allocation2 + $0x28] sm:$0xff]
    %v88 = vld [vmem:[#allocation2 + $0x30] sm:$0xff]
    %v89 = vld [vmem:[#allocation2 + $0x38] sm:$0xff]
    %v90 = vld [vmem:[#allocation2 + $0x40] sm:$0xff]
    %v91 = vld [vmem:[#allocation2 + $0x48] sm:$0xff]
    %v92 = vld [vmem:[#allocation2 + $0x50] sm:$0xff]
    %v93 = vld [vmem:[#allocation2 + $0x58] sm:$0xff]
    %v94 = vld [vmem:[#allocation2 + $0x60] sm:$0xff]
    %v95 = vld [vmem:[#allocation2 + $0x68] sm:$0xff]
    %v96 = vld [vmem:[#allocation2 + $0x70] sm:$0xff]
    %v97 = vld [vmem:[#allocation2 + $0x78] sm:$0xff]
    %v98 = vld [vmem:[#allocation2 + $0x80] sm:$0xff]
    %v99 = vld [vmem:[#allocation2 + $0x88] sm:$0xff]
    %v100 = vld [vmem:[#allocation2 + $0x90] sm:$0xff]
    %v101 = vld [vmem:[#allocation2 + $0x98] sm:$0xff]
    %v102 = vld [vmem:[#allocation2 + $0xa0] sm:$0xff]
    %v103 = vld [vmem:[#allocation2 + $0xa8] sm:$0xff]
    %v104 = vld [vmem:[#allocation2 + $0xb0] sm:$0xff]
    %v105 = vld [vmem:[#allocation2 + $0xb8] sm:$0xff]
    %v106 = vld [vmem:[#allocation2 + $0xc0] sm:$0xff]
    %v107 = vld [vmem:[#allocation2 + $0xc8] sm:$0xff]
    %v108 = vld [vmem:[#allocation2 + $0xd0] sm:$0xff]
    %v109 = vld [vmem:[#allocation2 + $0xd8] sm:$0xff]
    %v110 = vld [vmem:[#allocation2 + $0xe0] sm:$0xff]
    %v111 = vld [vmem:[#allocation2 + $0xe8] sm:$0xff]
    %v112 = vld [vmem:[#allocation2 + $0xf0] sm:$0xff]
    %v113 = vld [vmem:[#allocation2 + $0xf8] sm:$0xff]
    %v114 = vld [vmem:[#allocation2 + $0x100] sm:$0xff]
    %v115 = vld [vmem:[#allocation2 + $0x108] sm:$0xff]
    %v116 = vld [vmem:[#allocation2 + $0x110] sm:$0xff]
    %v117 = vld [vmem:[#allocation2 + $0x118] sm:$0xff]
    %v118 = vld [vmem:[#allocation2 + $0x120] sm:$0xff]
    %v119 = vld [vmem:[#allocation2 + $0x128] sm:$0xff]
    %v120 = vld [vmem:[#allocation2 + $0x130] sm:$0xff]
    %v121 = vld [vmem:[#allocation2 + $0x138] sm:$0xff]
    %v122 = vld [vmem:[#allocation2 + $0x140] sm:$0xff]
    %v123 = vld [vmem:[#allocation2 + $0x148] sm:$0xff]
    %v124 = vld [vmem:[#allocation2 + $0x150] sm:$0xff]
    %v125 = vld [vmem:[#allocation2 + $0x158] sm:$0xff]
    %v126 = vld [vmem:[#allocation2 + $0x160] sm:$0xff]
    %v127 = vld [vmem:[#allocation2 + $0x168] sm:$0xff]
    %v128 = vld [vmem:[#allocation2 + $0x170] sm:$0xff]
    %v129 = vld [vmem:[#allocation2 + $0x178] sm:$0xff]
    %v130 = vld [vmem:[#allocation2 + $0x180] sm:$0xff]
    %v131 = vld [vmem:[#allocation2 + $0x188] sm:$0xff]
    %v132 = vld [vmem:[#allocation2 + $0x190] sm:$0xff]
    %v133 = vld [vmem:[#allocation2 + $0x198] sm:$0xff]
    %v134 = vld [vmem:[#allocation2 + $0x1a0] sm:$0xff]
    %v135 = vld [vmem:[#allocation2 + $0x1a8] sm:$0xff]
    %v136 = vld [vmem:[#allocation2 + $0x1b0] sm:$0xff]
    %v137 = vld [vmem:[#allocation2 + $0x1b8] sm:$0xff]
    %v138 = vld [vmem:[#allocation2 + $0x1c0] sm:$0xff]
    %v139 = vld [vmem:[#allocation2 + $0x1c8] sm:$0xff]
    %v140 = vld [vmem:[#allocation2 + $0x1d0] sm:$0xff]
    %v141 = vld [vmem:[#allocation2 + $0x1d8] sm:$0xff]
    %v142 = vld [vmem:[#allocation2 + $0x1e0] sm:$0xff]
    %v143 = vld [vmem:[#allocation2 + $0x1e8] sm:$0xff]
    %v144 = vld [vmem:[#allocation2 + $0x1f0] sm:$0xff]
    %v145 = vld [vmem:[#allocation2 + $0x1f8] sm:$0xff]
    %v146 = vld [vmem:[%s2] sm:$0xf]
    %v148 = vlaneseq
    %v149 = vshrl.u32 %v148, 7
    %v150 = vsub.s32 0, %v149
    %v151 = vrot.slane %v146, %v150
    %v152 = vlaneseq
    %v153 = vshrl.u32 %v152, 7
    %v154 = vsub.s32 1, %v153
    %v155 = vrot.slane %v146, %v154
    %v156 = vlaneseq
    %v157 = vshrl.u32 %v156, 7
    %v158 = vsub.s32 2, %v157
    %v159 = vrot.slane %v146, %v158
    %v160 = vlaneseq
    %v161 = vshrl.u32 %v160, 7
    %v162 = vsub.s32 3, %v161
    %v163 = vrot.slane %v146, %v162
    %v232 = vunpack.c.l.b16 %v82
    %v233 = vunpack.c.h.b16 %v82
    %v234 = vunpack.c.l.b16 %v83
    %v235 = vunpack.c.h.b16 %v83
    %v236 = vunpack.c.l.b16 %v84
    %v237 = vunpack.c.h.b16 %v84
    %v238 = vunpack.c.l.b16 %v85
    %v239 = vunpack.c.h.b16 %v85
    %v240 = vunpack.c.l.b16 %v86
    %v241 = vunpack.c.h.b16 %v86
    %v242 = vunpack.c.l.b16 %v87
    %v243 = vunpack.c.h.b16 %v87
    %v244 = vunpack.c.l.b16 %v88
    %v245 = vunpack.c.h.b16 %v88
    %v246 = vunpack.c.l.b16 %v89
    %v247 = vunpack.c.h.b16 %v89
    %v248 = vunpack.c.l.b16 %v90
    %v249 = vunpack.c.h.b16 %v90
    %v250 = vunpack.c.l.b16 %v91
    %v251 = vunpack.c.h.b16 %v91
    %v252 = vunpack.c.l.b16 %v92
    %v253 = vunpack.c.h.b16 %v92
    %v254 = vunpack.c.l.b16 %v93
    %v255 = vunpack.c.h.b16 %v93
    %v256 = vunpack.c.l.b16 %v94
    %v257 = vunpack.c.h.b16 %v94
    %v258 = vunpack.c.l.b16 %v95
    %v259 = vunpack.c.h.b16 %v95
    %v260 = vunpack.c.l.b16 %v96
    %v261 = vunpack.c.h.b16 %v96
    %v262 = vunpack.c.l.b16 %v97
    %v263 = vunpack.c.h.b16 %v97
    %v264 = vunpack.c.l.b16 %v98
    %v265 = vunpack.c.h.b16 %v98
    %v266 = vunpack.c.l.b16 %v99
    %v267 = vunpack.c.h.b16 %v99
    %v268 = vunpack.c.l.b16 %v100
    %v269 = vunpack.c.h.b16 %v100
    %v270 = vunpack.c.l.b16 %v101
    %v271 = vunpack.c.h.b16 %v101
    %v272 = vunpack.c.l.b16 %v102
    %v273 = vunpack.c.h.b16 %v102
    %v274 = vunpack.c.l.b16 %v103
    %v275 = vunpack.c.h.b16 %v103
    %v276 = vunpack.c.l.b16 %v104
    %v277 = vunpack.c.h.b16 %v104
    %v278 = vunpack.c.l.b16 %v105
    %v279 = vunpack.c.h.b16 %v105
    %v280 = vunpack.c.l.b16 %v106
    %v281 = vunpack.c.h.b16 %v106
    %v282 = vunpack.c.l.b16 %v107
    %v283 = vunpack.c.h.b16 %v107
    %v284 = vunpack.c.l.b16 %v108
    %v285 = vunpack.c.h.b16 %v108
    %v286 = vunpack.c.l.b16 %v109
    %v287 = vunpack.c.h.b16 %v109
    %v288 = vunpack.c.l.b16 %v110
    %v289 = vunpack.c.h.b16 %v110
    %v290 = vunpack.c.l.b16 %v111
    %v291 = vunpack.c.h.b16 %v111
    %v292 = vunpack.c.l.b16 %v112
    %v293 = vunpack.c.h.b16 %v112
    %v294 = vunpack.c.l.b16 %v113
    %v295 = vunpack.c.h.b16 %v113
    %v296 = vunpack.c.l.b16 %v114
    %v297 = vunpack.c.h.b16 %v114
    %v298 = vunpack.c.l.b16 %v115
    %v299 = vunpack.c.h.b16 %v115
    %v300 = vunpack.c.l.b16 %v116
    %v301 = vunpack.c.h.b16 %v116
    %v302 = vunpack.c.l.b16 %v117
    %v303 = vunpack.c.h.b16 %v117
    %v304 = vunpack.c.l.b16 %v118
    %v305 = vunpack.c.h.b16 %v118
    %v306 = vunpack.c.l.b16 %v119
    %v307 = vunpack.c.h.b16 %v119
    %v308 = vunpack.c.l.b16 %v120
    %v309 = vunpack.c.h.b16 %v120
    %v310 = vunpack.c.l.b16 %v121
    %v311 = vunpack.c.h.b16 %v121
    %v312 = vunpack.c.l.b16 %v122
    %v313 = vunpack.c.h.b16 %v122
    %v314 = vunpack.c.l.b16 %v123
    %v315 = vunpack.c.h.b16 %v123
    %v316 = vunpack.c.l.b16 %v124
    %v317 = vunpack.c.h.b16 %v124
    %v318 = vunpack.c.l.b16 %v125
    %v319 = vunpack.c.h.b16 %v125
    %v320 = vunpack.c.l.b16 %v126
    %v321 = vunpack.c.h.b16 %v126
    %v322 = vunpack.c.l.b16 %v127
    %v323 = vunpack.c.h.b16 %v127
    %v324 = vunpack.c.l.b16 %v128
    %v325 = vunpack.c.h.b16 %v128
    %v326 = vunpack.c.l.b16 %v129
    %v327 = vunpack.c.h.b16 %v129
    %v328 = vunpack.c.l.b16 %v130
    %v329 = vunpack.c.h.b16 %v130
    %v330 = vunpack.c.l.b16 %v131
    %v331 = vunpack.c.h.b16 %v131
    %v332 = vunpack.c.l.b16 %v132
    %v333 = vunpack.c.h.b16 %v132
    %v334 = vunpack.c.l.b16 %v133
    %v335 = vunpack.c.h.b16 %v133
    %v336 = vunpack.c.l.b16 %v134
    %v337 = vunpack.c.h.b16 %v134
    %v338 = vunpack.c.l.b16 %v135
    %v339 = vunpack.c.h.b16 %v135
    %v340 = vunpack.c.l.b16 %v136
    %v341 = vunpack.c.h.b16 %v136
    %v342 = vunpack.c.l.b16 %v137
    %v343 = vunpack.c.h.b16 %v137
    %v344 = vunpack.c.l.b16 %v138
    %v345 = vunpack.c.h.b16 %v138
    %v346 = vunpack.c.l.b16 %v139
    %v347 = vunpack.c.h.b16 %v139
    %v348 = vunpack.c.l.b16 %v140
    %v349 = vunpack.c.h.b16 %v140
    %v350 = vunpack.c.l.b16 %v141
    %v351 = vunpack.c.h.b16 %v141
    %v352 = vunpack.c.l.b16 %v142
    %v353 = vunpack.c.h.b16 %v142
    %v354 = vunpack.c.l.b16 %v143
    %v355 = vunpack.c.h.b16 %v143
    %v356 = vunpack.c.l.b16 %v144
    %v357 = vunpack.c.h.b16 %v144
    %v358 = vunpack.c.l.b16 %v145
    %v359 = vunpack.c.h.b16 %v145
    %v360 = vpack.c.b16 %v236, %v232
    %v361 = vpack.c.b16 %v237, %v233
    %v362 = vpack.c.b16 %v238, %v234
    %v363 = vpack.c.b16 %v239, %v235
    %v364 = vpack.c.b16 %v244, %v240
    %v365 = vpack.c.b16 %v245, %v241
    %v366 = vpack.c.b16 %v246, %v242
    %v367 = vpack.c.b16 %v247, %v243
    %v368 = vpack.c.b16 %v252, %v248
    %v369 = vpack.c.b16 %v253, %v249
    %v370 = vpack.c.b16 %v254, %v250
    %v371 = vpack.c.b16 %v255, %v251
    %v372 = vpack.c.b16 %v260, %v256
    %v373 = vpack.c.b16 %v261, %v257
    %v374 = vpack.c.b16 %v262, %v258
    %v375 = vpack.c.b16 %v263, %v259
    %v376 = vpack.c.b16 %v268, %v264
    %v377 = vpack.c.b16 %v269, %v265
    %v378 = vpack.c.b16 %v270, %v266
    %v379 = vpack.c.b16 %v271, %v267
    %v380 = vpack.c.b16 %v276, %v272
    %v381 = vpack.c.b16 %v277, %v273
    %v382 = vpack.c.b16 %v278, %v274
    %v383 = vpack.c.b16 %v279, %v275
    %v384 = vpack.c.b16 %v284, %v280
    %v385 = vpack.c.b16 %v285, %v281
    %v386 = vpack.c.b16 %v286, %v282
    %v387 = vpack.c.b16 %v287, %v283
    %v388 = vpack.c.b16 %v292, %v288
    %v389 = vpack.c.b16 %v293, %v289
    %v390 = vpack.c.b16 %v294, %v290
    %v391 = vpack.c.b16 %v295, %v291
    %v392 = vpack.c.b16 %v300, %v296
    %v393 = vpack.c.b16 %v301, %v297
    %v394 = vpack.c.b16 %v302, %v298
    %v395 = vpack.c.b16 %v303, %v299
    %v396 = vpack.c.b16 %v308, %v304
    %v397 = vpack.c.b16 %v309, %v305
    %v398 = vpack.c.b16 %v310, %v306
    %v399 = vpack.c.b16 %v311, %v307
    %v400 = vpack.c.b16 %v316, %v312
    %v401 = vpack.c.b16 %v317, %v313
    %v402 = vpack.c.b16 %v318, %v314
    %v403 = vpack.c.b16 %v319, %v315
    %v404 = vpack.c.b16 %v324, %v320
    %v405 = vpack.c.b16 %v325, %v321
    %v406 = vpack.c.b16 %v326, %v322
    %v407 = vpack.c.b16 %v327, %v323
    %v408 = vpack.c.b16 %v332, %v328
    %v409 = vpack.c.b16 %v333, %v329
    %v410 = vpack.c.b16 %v334, %v330
    %v411 = vpack.c.b16 %v335, %v331
    %v412 = vpack.c.b16 %v340, %v336
    %v413 = vpack.c.b16 %v341, %v337
    %v414 = vpack.c.b16 %v342, %v338
    %v415 = vpack.c.b16 %v343, %v339
    %v416 = vpack.c.b16 %v348, %v344
    %v417 = vpack.c.b16 %v349, %v345
    %v418 = vpack.c.b16 %v350, %v346
    %v419 = vpack.c.b16 %v351, %v347
    %v420 = vpack.c.b16 %v356, %v352
    %v421 = vpack.c.b16 %v357, %v353
    %v422 = vpack.c.b16 %v358, %v354
    %v423 = vpack.c.b16 %v359, %v355
    %488 = vmatprep.subr.bf16.mxu0 %v361
    %489 = vmatpush1.bf16.msra.mxu0 %v360
    %490 = vmatprep.subr.bf16.mxu0 %v365
    %491 = vmatpush1.bf16.msra.mxu0 %v364
    %492 = vmatprep.subr.bf16.mxu0 %v369
    %493 = vmatpush1.bf16.msra.mxu0 %v368
    %494 = vmatprep.subr.bf16.mxu0 %v373
    %495 = vmatpush1.bf16.msra.mxu0 %v372
    %496 = vmatprep.subr.bf16.mxu0 %v377
    %497 = vmatpush1.bf16.msra.mxu0 %v376
    %498 = vmatprep.subr.bf16.mxu0 %v381
    %499 = vmatpush1.bf16.msra.mxu0 %v380
    %500 = vmatprep.subr.bf16.mxu0 %v385
    %501 = vmatpush1.bf16.msra.mxu0 %v384
    %502 = vmatprep.subr.bf16.mxu0 %v389
    %503 = vmatpush1.bf16.msra.mxu0 %v388
    %504 = vmatprep.subr.bf16.mxu0 %v393
    %505 = vmatpush1.bf16.msra.mxu0 %v392
    %506 = vmatprep.subr.bf16.mxu0 %v397
    %507 = vmatpush1.bf16.msra.mxu0 %v396
    %508 = vmatprep.subr.bf16.mxu0 %v401
    %509 = vmatpush1.bf16.msra.mxu0 %v400
    %510 = vmatprep.subr.bf16.mxu0 %v405
    %511 = vmatpush1.bf16.msra.mxu0 %v404
    %512 = vmatprep.subr.bf16.mxu0 %v409
    %513 = vmatpush1.bf16.msra.mxu0 %v408
    %514 = vmatprep.subr.bf16.mxu0 %v413
    %515 = vmatpush1.bf16.msra.mxu0 %v412
    %516 = vmatprep.subr.bf16.mxu0 %v417
    %517 = vmatpush1.bf16.msra.mxu0 %v416
    %518 = vmatprep.subr.bf16.mxu0 %v421
    %519 = vmatpush1.bf16.msra.mxu0 %v420
    %520 = vmatprep.mubr.bf16.mxu0 %v81
    %521 = vmatmul.mubr.bf16.gmra.mrb[0].mxu0 %v80
    %v522 = vpop.f32.mrb[0].mxu0
    %v523 = vadd.f32 %v151, %v522
    %v524 = vpop.f32.mrb[0].mxu0
    %v525 = vadd.f32 %v155, %v524
    %v526 = vpop.f32.mrb[0].mxu0
    %v527 = vpop.f32.mrb[0].mxu0
    %528 = vdwg.mxu0
    %529 = vmatprep.subr.bf16.mxu0 %v363
    %530 = vmatpush1.bf16.msra.mxu0 %v362
    %531 = vmatprep.subr.bf16.mxu0 %v367
    %532 = vmatpush1.bf16.msra.mxu0 %v366
    %533 = vmatprep.subr.bf16.mxu0 %v371
    %534 = vmatpush1.bf16.msra.mxu0 %v370
    %535 = vmatprep.subr.bf16.mxu0 %v375
    %536 = vmatpush1.bf16.msra.mxu0 %v374
    %537 = vmatprep.subr.bf16.mxu0 %v379
    %538 = vmatpush1.bf16.msra.mxu0 %v378
    %539 = vmatprep.subr.bf16.mxu0 %v383
    %540 = vmatpush1.bf16.msra.mxu0 %v382
    %541 = vmatprep.subr.bf16.mxu0 %v387
    %542 = vmatpush1.bf16.msra.mxu0 %v386
    %543 = vmatprep.subr.bf16.mxu0 %v391
    %544 = vmatpush1.bf16.msra.mxu0 %v390
    %545 = vmatprep.subr.bf16.mxu0 %v395
    %546 = vmatpush1.bf16.msra.mxu0 %v394
    %547 = vmatprep.subr.bf16.mxu0 %v399
    %548 = vmatpush1.bf16.msra.mxu0 %v398
    %549 = vmatprep.subr.bf16.mxu0 %v403
    %550 = vmatpush1.bf16.msra.mxu0 %v402
    %551 = vmatprep.subr.bf16.mxu0 %v407
    %552 = vmatpush1.bf16.msra.mxu0 %v406
    %553 = vmatprep.subr.bf16.mxu0 %v411
    %554 = vmatpush1.bf16.msra.mxu0 %v410
    %555 = vmatprep.subr.bf16.mxu0 %v415
    %556 = vmatpush1.bf16.msra.mxu0 %v414
    %557 = vmatprep.subr.bf16.mxu0 %v419
    %558 = vmatpush1.bf16.msra.mxu0 %v418
    %559 = vmatprep.subr.bf16.mxu0 %v423
    %560 = vmatpush1.bf16.msra.mxu0 %v422
    %561 = vmatprep.mubr.bf16.mxu0 %v81
    %562 = vmatmul.mubr.bf16.gmra.mrb[0].mxu0 %v80
    %v563 = vpop.f32.mrb[0].mxu0
    %v564 = vadd.f32 %v159, %v563
    %v565 = vpop.f32.mrb[0].mxu0
    %v566 = vadd.f32 %v163, %v565
    %v567 = vpop.f32.mrb[0].mxu0
    %v568 = vpop.f32.mrb[0].mxu0
    %569 = vdwg.mxu0
    %v570 = vmax.f32 %v523, 0.0
    %v571 = vmax.f32 %v525, 0.0
    %v572 = vmax.f32 %v564, 0.0
    %v573 = vmax.f32 %v566, 0.0
    %v574 = vpack.c.bf16 %v570, %v570
    %v575 = vpack.c.bf16 %v571, %v571
    %v576 = vpack.c.bf16 %v572, %v572
    %v577 = vpack.c.bf16 %v573, %v573
    %v578 = vld [vmem:[#allocation4] sm:$0xff]
    %v579 = vld [vmem:[#allocation4 + $0x8] sm:$0xff]
    %v580 = vld [vmem:[#allocation4 + $0x10] sm:$0xff]
    %v581 = vld [vmem:[#allocation4 + $0x18] sm:$0xff]
    %v582 = vld [vmem:[#allocation4 + $0x20] sm:$0xff]
    %v583 = vld [vmem:[#allocation4 + $0x28] sm:$0xff]
    %v584 = vld [vmem:[#allocation4 + $0x30] sm:$0xff]
    %v585 = vld [vmem:[#allocation4 + $0x38] sm:$0xff]
    %v586 = vld [vmem:[#allocation4 + $0x40] sm:$0xff]
    %v587 = vld [vmem:[#allocation4 + $0x48] sm:$0xff]
    %v588 = vld [vmem:[#allocation4 + $0x50] sm:$0xff]
    %v589 = vld [vmem:[#allocation4 + $0x58] sm:$0xff]
    %v590 = vld [vmem:[#allocation4 + $0x60] sm:$0xff]
    %v591 = vld [vmem:[#allocation4 + $0x68] sm:$0xff]
    %v592 = vld [vmem:[#allocation4 + $0x70] sm:$0xff]
    %v593 = vld [vmem:[#allocation4 + $0x78] sm:$0xff]
    %v594 = vld [vmem:[#allocation4 + $0x80] sm:$0xff]
    %v595 = vld [vmem:[#allocation4 + $0x88] sm:$0xff]
    %v596 = vld [vmem:[#allocation4 + $0x90] sm:$0xff]
    %v597 = vld [vmem:[#allocation4 + $0x98] sm:$0xff]
    %v598 = vld [vmem:[#allocation4 + $0xa0] sm:$0xff]
    %v599 = vld [vmem:[#allocation4 + $0xa8] sm:$0xff]
    %v600 = vld [vmem:[#allocation4 + $0xb0] sm:$0xff]
    %v601 = vld [vmem:[#allocation4 + $0xb8] sm:$0xff]
    %v602 = vld [vmem:[#allocation4 + $0xc0] sm:$0xff]
    %v603 = vld [vmem:[#allocation4 + $0xc8] sm:$0xff]
    %v604 = vld [vmem:[#allocation4 + $0xd0] sm:$0xff]
    %v605 = vld [vmem:[#allocation4 + $0xd8] sm:$0xff]
    %v606 = vld [vmem:[#allocation4 + $0xe0] sm:$0xff]
    %v607 = vld [vmem:[#allocation4 + $0xe8] sm:$0xff]
    %v608 = vld [vmem:[#allocation4 + $0xf0] sm:$0xff]
    %v609 = vld [vmem:[#allocation4 + $0xf8] sm:$0xff]
    %v610 = vld [vmem:[#allocation4 + $0x100] sm:$0xff]
    %v611 = vld [vmem:[#allocation4 + $0x108] sm:$0xff]
    %v612 = vld [vmem:[#allocation4 + $0x110] sm:$0xff]
    %v613 = vld [vmem:[#allocation4 + $0x118] sm:$0xff]
    %v614 = vld [vmem:[#allocation4 + $0x120] sm:$0xff]
    %v615 = vld [vmem:[#allocation4 + $0x128] sm:$0xff]
    %v616 = vld [vmem:[#allocation4 + $0x130] sm:$0xff]
    %v617 = vld [vmem:[#allocation4 + $0x138] sm:$0xff]
    %v618 = vld [vmem:[#allocation4 + $0x140] sm:$0xff]
    %v619 = vld [vmem:[#allocation4 + $0x148] sm:$0xff]
    %v620 = vld [vmem:[#allocation4 + $0x150] sm:$0xff]
    %v621 = vld [vmem:[#allocation4 + $0x158] sm:$0xff]
    %v622 = vld [vmem:[#allocation4 + $0x160] sm:$0xff]
    %v623 = vld [vmem:[#allocation4 + $0x168] sm:$0xff]
    %v624 = vld [vmem:[#allocation4 + $0x170] sm:$0xff]
    %v625 = vld [vmem:[#allocation4 + $0x178] sm:$0xff]
    %v626 = vld [vmem:[#allocation4 + $0x180] sm:$0xff]
    %v627 = vld [vmem:[#allocation4 + $0x188] sm:$0xff]
    %v628 = vld [vmem:[#allocation4 + $0x190] sm:$0xff]
    %v629 = vld [vmem:[#allocation4 + $0x198] sm:$0xff]
    %v630 = vld [vmem:[#allocation4 + $0x1a0] sm:$0xff]
    %v631 = vld [vmem:[#allocation4 + $0x1a8] sm:$0xff]
    %v632 = vld [vmem:[#allocation4 + $0x1b0] sm:$0xff]
    %v633 = vld [vmem:[#allocation4 + $0x1b8] sm:$0xff]
    %v634 = vld [vmem:[#allocation4 + $0x1c0] sm:$0xff]
    %v635 = vld [vmem:[#allocation4 + $0x1c8] sm:$0xff]
    %v636 = vld [vmem:[#allocation4 + $0x1d0] sm:$0xff]
    %v637 = vld [vmem:[#allocation4 + $0x1d8] sm:$0xff]
    %v638 = vld [vmem:[#allocation4 + $0x1e0] sm:$0xff]
    %v639 = vld [vmem:[#allocation4 + $0x1e8] sm:$0xff]
    %v640 = vld [vmem:[#allocation4 + $0x1f0] sm:$0xff]
    %v641 = vld [vmem:[#allocation4 + $0x1f8] sm:$0xff]
    %v642 = vld [vmem:[#allocation4 + $0x200] sm:$0xff]
    %v643 = vld [vmem:[#allocation4 + $0x208] sm:$0xff]
    %v644 = vld [vmem:[#allocation4 + $0x210] sm:$0xff]
    %v645 = vld [vmem:[#allocation4 + $0x218] sm:$0xff]
    %v646 = vld [vmem:[#allocation4 + $0x220] sm:$0xff]
    %v647 = vld [vmem:[#allocation4 + $0x228] sm:$0xff]
    %v648 = vld [vmem:[#allocation4 + $0x230] sm:$0xff]
    %v649 = vld [vmem:[#allocation4 + $0x238] sm:$0xff]
    %v650 = vld [vmem:[#allocation4 + $0x240] sm:$0xff]
    %v651 = vld [vmem:[#allocation4 + $0x248] sm:$0xff]
    %v652 = vld [vmem:[#allocation4 + $0x250] sm:$0xff]
    %v653 = vld [vmem:[#allocation4 + $0x258] sm:$0xff]
    %v654 = vld [vmem:[#allocation4 + $0x260] sm:$0xff]
    %v655 = vld [vmem:[#allocation4 + $0x268] sm:$0xff]
    %v656 = vld [vmem:[#allocation4 + $0x270] sm:$0xff]
    %v657 = vld [vmem:[#allocation4 + $0x278] sm:$0xff]
    %v658 = vld [vmem:[#allocation4 + $0x280] sm:$0xff]
    %v659 = vld [vmem:[#allocation4 + $0x288] sm:$0xff]
    %v660 = vld [vmem:[#allocation4 + $0x290] sm:$0xff]
    %v661 = vld [vmem:[#allocation4 + $0x298] sm:$0xff]
    %v662 = vld [vmem:[#allocation4 + $0x2a0] sm:$0xff]
    %v663 = vld [vmem:[#allocation4 + $0x2a8] sm:$0xff]
    %v664 = vld [vmem:[#allocation4 + $0x2b0] sm:$0xff]
    %v665 = vld [vmem:[#allocation4 + $0x2b8] sm:$0xff]
    %v666 = vld [vmem:[#allocation4 + $0x2c0] sm:$0xff]
    %v667 = vld [vmem:[#allocation4 + $0x2c8] sm:$0xff]
    %v668 = vld [vmem:[#allocation4 + $0x2d0] sm:$0xff]
    %v669 = vld [vmem:[#allocation4 + $0x2d8] sm:$0xff]
    %v670 = vld [vmem:[#allocation4 + $0x2e0] sm:$0xff]
    %v671 = vld [vmem:[#allocation4 + $0x2e8] sm:$0xff]
    %v672 = vld [vmem:[#allocation4 + $0x2f0] sm:$0xff]
    %v673 = vld [vmem:[#allocation4 + $0x2f8] sm:$0xff]
    %v674 = vld [vmem:[#allocation4 + $0x300] sm:$0xff]
    %v675 = vld [vmem:[#allocation4 + $0x308] sm:$0xff]
    %v676 = vld [vmem:[#allocation4 + $0x310] sm:$0xff]
    %v677 = vld [vmem:[#allocation4 + $0x318] sm:$0xff]
    %v678 = vld [vmem:[#allocation4 + $0x320] sm:$0xff]
    %v679 = vld [vmem:[#allocation4 + $0x328] sm:$0xff]
    %v680 = vld [vmem:[#allocation4 + $0x330] sm:$0xff]
    %v681 = vld [vmem:[#allocation4 + $0x338] sm:$0xff]
    %v682 = vld [vmem:[#allocation4 + $0x340] sm:$0xff]
    %v683 = vld [vmem:[#allocation4 + $0x348] sm:$0xff]
    %v684 = vld [vmem:[#allocation4 + $0x350] sm:$0xff]
    %v685 = vld [vmem:[#allocation4 + $0x358] sm:$0xff]
    %v686 = vld [vmem:[#allocation4 + $0x360] sm:$0xff]
    %v687 = vld [vmem:[#allocation4 + $0x368] sm:$0xff]
    %v688 = vld [vmem:[#allocation4 + $0x370] sm:$0xff]
    %v689 = vld [vmem:[#allocation4 + $0x378] sm:$0xff]
    %v690 = vld [vmem:[#allocation4 + $0x380] sm:$0xff]
    %v691 = vld [vmem:[#allocation4 + $0x388] sm:$0xff]
    %v692 = vld [vmem:[#allocation4 + $0x390] sm:$0xff]
    %v693 = vld [vmem:[#allocation4 + $0x398] sm:$0xff]
    %v694 = vld [vmem:[#allocation4 + $0x3a0] sm:$0xff]
    %v695 = vld [vmem:[#allocation4 + $0x3a8] sm:$0xff]
    %v696 = vld [vmem:[#allocation4 + $0x3b0] sm:$0xff]
    %v697 = vld [vmem:[#allocation4 + $0x3b8] sm:$0xff]
    %v698 = vld [vmem:[#allocation4 + $0x3c0] sm:$0xff]
    %v699 = vld [vmem:[#allocation4 + $0x3c8] sm:$0xff]
    %v700 = vld [vmem:[#allocation4 + $0x3d0] sm:$0xff]
    %v701 = vld [vmem:[#allocation4 + $0x3d8] sm:$0xff]
    %v702 = vld [vmem:[#allocation4 + $0x3e0] sm:$0xff]
    %v703 = vld [vmem:[#allocation4 + $0x3e8] sm:$0xff]
    %v704 = vld [vmem:[#allocation4 + $0x3f0] sm:$0xff]
    %v705 = vld [vmem:[#allocation4 + $0x3f8] sm:$0xff]
    %v706 = vld [vmem:[%s4] sm:$0xf]
    %v708 = vlaneseq
    %v709 = vshrl.u32 %v708, 7
    %v710 = vsub.s32 0, %v709
    %v711 = vrot.slane %v706, %v710
    %v712 = vlaneseq
    %v713 = vshrl.u32 %v712, 7
    %v714 = vsub.s32 1, %v713
    %v715 = vrot.slane %v706, %v714
    %v716 = vlaneseq
    %v717 = vshrl.u32 %v716, 7
    %v718 = vsub.s32 2, %v717
    %v719 = vrot.slane %v706, %v718
    %v720 = vlaneseq
    %v721 = vshrl.u32 %v720, 7
    %v722 = vsub.s32 3, %v721
    %v723 = vrot.slane %v706, %v722
    %v856 = vunpack.c.l.b16 %v578
    %v857 = vunpack.c.h.b16 %v578
    %v858 = vunpack.c.l.b16 %v579
    %v859 = vunpack.c.h.b16 %v579
    %v860 = vunpack.c.l.b16 %v580
    %v861 = vunpack.c.h.b16 %v580
    %v862 = vunpack.c.l.b16 %v581
    %v863 = vunpack.c.h.b16 %v581
    %v864 = vunpack.c.l.b16 %v582
    %v865 = vunpack.c.h.b16 %v582
    %v866 = vunpack.c.l.b16 %v583
    %v867 = vunpack.c.h.b16 %v583
    %v868 = vunpack.c.l.b16 %v584
    %v869 = vunpack.c.h.b16 %v584
    %v870 = vunpack.c.l.b16 %v585
    %v871 = vunpack.c.h.b16 %v585
    %v872 = vunpack.c.l.b16 %v586
    %v873 = vunpack.c.h.b16 %v586
    %v874 = vunpack.c.l.b16 %v587
    %v875 = vunpack.c.h.b16 %v587
    %v876 = vunpack.c.l.b16 %v588
    %v877 = vunpack.c.h.b16 %v588
    %v878 = vunpack.c.l.b16 %v589
    %v879 = vunpack.c.h.b16 %v589
    %v880 = vunpack.c.l.b16 %v590
    %v881 = vunpack.c.h.b16 %v590
    %v882 = vunpack.c.l.b16 %v591
    %v883 = vunpack.c.h.b16 %v591
    %v884 = vunpack.c.l.b16 %v592
    %v885 = vunpack.c.h.b16 %v592
    %v886 = vunpack.c.l.b16 %v593
    %v887 = vunpack.c.h.b16 %v593
    %v888 = vunpack.c.l.b16 %v594
    %v889 = vunpack.c.h.b16 %v594
    %v890 = vunpack.c.l.b16 %v595
    %v891 = vunpack.c.h.b16 %v595
    %v892 = vunpack.c.l.b16 %v596
    %v893 = vunpack.c.h.b16 %v596
    %v894 = vunpack.c.l.b16 %v597
    %v895 = vunpack.c.h.b16 %v597
    %v896 = vunpack.c.l.b16 %v598
    %v897 = vunpack.c.h.b16 %v598
    %v898 = vunpack.c.l.b16 %v599
    %v899 = vunpack.c.h.b16 %v599
    %v900 = vunpack.c.l.b16 %v600
    %v901 = vunpack.c.h.b16 %v600
    %v902 = vunpack.c.l.b16 %v601
    %v903 = vunpack.c.h.b16 %v601
    %v904 = vunpack.c.l.b16 %v602
    %v905 = vunpack.c.h.b16 %v602
    %v906 = vunpack.c.l.b16 %v603
    %v907 = vunpack.c.h.b16 %v603
    %v908 = vunpack.c.l.b16 %v604
    %v909 = vunpack.c.h.b16 %v604
    %v910 = vunpack.c.l.b16 %v605
    %v911 = vunpack.c.h.b16 %v605
    %v912 = vunpack.c.l.b16 %v606
    %v913 = vunpack.c.h.b16 %v606
    %v914 = vunpack.c.l.b16 %v607
    %v915 = vunpack.c.h.b16 %v607
    %v916 = vunpack.c.l.b16 %v608
    %v917 = vunpack.c.h.b16 %v608
    %v918 = vunpack.c.l.b16 %v609
    %v919 = vunpack.c.h.b16 %v609
    %v920 = vunpack.c.l.b16 %v610
    %v921 = vunpack.c.h.b16 %v610
    %v922 = vunpack.c.l.b16 %v611
    %v923 = vunpack.c.h.b16 %v611
    %v924 = vunpack.c.l.b16 %v612
    %v925 = vunpack.c.h.b16 %v612
    %v926 = vunpack.c.l.b16 %v613
    %v927 = vunpack.c.h.b16 %v613
    %v928 = vunpack.c.l.b16 %v614
    %v929 = vunpack.c.h.b16 %v614
    %v930 = vunpack.c.l.b16 %v615
    %v931 = vunpack.c.h.b16 %v615
    %v932 = vunpack.c.l.b16 %v616
    %v933 = vunpack.c.h.b16 %v616
    %v934 = vunpack.c.l.b16 %v617
    %v935 = vunpack.c.h.b16 %v617
    %v936 = vunpack.c.l.b16 %v618
    %v937 = vunpack.c.h.b16 %v618
    %v938 = vunpack.c.l.b16 %v619
    %v939 = vunpack.c.h.b16 %v619
    %v940 = vunpack.c.l.b16 %v620
    %v941 = vunpack.c.h.b16 %v620
    %v942 = vunpack.c.l.b16 %v621
    %v943 = vunpack.c.h.b16 %v621
    %v944 = vunpack.c.l.b16 %v622
    %v945 = vunpack.c.h.b16 %v622
    %v946 = vunpack.c.l.b16 %v623
    %v947 = vunpack.c.h.b16 %v623
    %v948 = vunpack.c.l.b16 %v624
    %v949 = vunpack.c.h.b16 %v624
    %v950 = vunpack.c.l.b16 %v625
    %v951 = vunpack.c.h.b16 %v625
    %v952 = vunpack.c.l.b16 %v626
    %v953 = vunpack.c.h.b16 %v626
    %v954 = vunpack.c.l.b16 %v627
    %v955 = vunpack.c.h.b16 %v627
    %v956 = vunpack.c.l.b16 %v628
    %v957 = vunpack.c.h.b16 %v628
    %v958 = vunpack.c.l.b16 %v629
    %v959 = vunpack.c.h.b16 %v629
    %v960 = vunpack.c.l.b16 %v630
    %v961 = vunpack.c.h.b16 %v630
    %v962 = vunpack.c.l.b16 %v631
    %v963 = vunpack.c.h.b16 %v631
    %v964 = vunpack.c.l.b16 %v632
    %v965 = vunpack.c.h.b16 %v632
    %v966 = vunpack.c.l.b16 %v633
    %v967 = vunpack.c.h.b16 %v633
    %v968 = vunpack.c.l.b16 %v634
    %v969 = vunpack.c.h.b16 %v634
    %v970 = vunpack.c.l.b16 %v635
    %v971 = vunpack.c.h.b16 %v635
    %v972 = vunpack.c.l.b16 %v636
    %v973 = vunpack.c.h.b16 %v636
    %v974 = vunpack.c.l.b16 %v637
    %v975 = vunpack.c.h.b16 %v637
    %v976 = vunpack.c.l.b16 %v638
    %v977 = vunpack.c.h.b16 %v638
    %v978 = vunpack.c.l.b16 %v639
    %v979 = vunpack.c.h.b16 %v639
    %v980 = vunpack.c.l.b16 %v640
    %v981 = vunpack.c.h.b16 %v640
    %v982 = vunpack.c.l.b16 %v641
    %v983 = vunpack.c.h.b16 %v641
    %v984 = vunpack.c.l.b16 %v642
    %v985 = vunpack.c.h.b16 %v642
    %v986 = vunpack.c.l.b16 %v643
    %v987 = vunpack.c.h.b16 %v643
    %v988 = vunpack.c.l.b16 %v644
    %v989 = vunpack.c.h.b16 %v644
    %v990 = vunpack.c.l.b16 %v645
    %v991 = vunpack.c.h.b16 %v645
    %v992 = vunpack.c.l.b16 %v646
    %v993 = vunpack.c.h.b16 %v646
    %v994 = vunpack.c.l.b16 %v647
    %v995 = vunpack.c.h.b16 %v647
    %v996 = vunpack.c.l.b16 %v648
    %v997 = vunpack.c.h.b16 %v648
    %v998 = vunpack.c.l.b16 %v649
    %v999 = vunpack.c.h.b16 %v649
    %v1000 = vunpack.c.l.b16 %v650
    %v1001 = vunpack.c.h.b16 %v650
    %v1002 = vunpack.c.l.b16 %v651
    %v1003 = vunpack.c.h.b16 %v651
    %v1004 = vunpack.c.l.b16 %v652
    %v1005 = vunpack.c.h.b16 %v652
    %v1006 = vunpack.c.l.b16 %v653
    %v1007 = vunpack.c.h.b16 %v653
    %v1008 = vunpack.c.l.b16 %v654
    %v1009 = vunpack.c.h.b16 %v654
    %v1010 = vunpack.c.l.b16 %v655
    %v1011 = vunpack.c.h.b16 %v655
    %v1012 = vunpack.c.l.b16 %v656
    %v1013 = vunpack.c.h.b16 %v656
    %v1014 = vunpack.c.l.b16 %v657
    %v1015 = vunpack.c.h.b16 %v657
    %v1016 = vunpack.c.l.b16 %v658
    %v1017 = vunpack.c.h.b16 %v658
    %v1018 = vunpack.c.l.b16 %v659
    %v1019 = vunpack.c.h.b16 %v659
    %v1020 = vunpack.c.l.b16 %v660
    %v1021 = vunpack.c.h.b16 %v660
    %v1022 = vunpack.c.l.b16 %v661
    %v1023 = vunpack.c.h.b16 %v661
    %v1024 = vunpack.c.l.b16 %v662
    %v1025 = vunpack.c.h.b16 %v662
    %v1026 = vunpack.c.l.b16 %v663
    %v1027 = vunpack.c.h.b16 %v663
    %v1028 = vunpack.c.l.b16 %v664
    %v1029 = vunpack.c.h.b16 %v664
    %v1030 = vunpack.c.l.b16 %v665
    %v1031 = vunpack.c.h.b16 %v665
    %v1032 = vunpack.c.l.b16 %v666
    %v1033 = vunpack.c.h.b16 %v666
    %v1034 = vunpack.c.l.b16 %v667
    %v1035 = vunpack.c.h.b16 %v667
    %v1036 = vunpack.c.l.b16 %v668
    %v1037 = vunpack.c.h.b16 %v668
    %v1038 = vunpack.c.l.b16 %v669
    %v1039 = vunpack.c.h.b16 %v669
    %v1040 = vunpack.c.l.b16 %v670
    %v1041 = vunpack.c.h.b16 %v670
    %v1042 = vunpack.c.l.b16 %v671
    %v1043 = vunpack.c.h.b16 %v671
    %v1044 = vunpack.c.l.b16 %v672
    %v1045 = vunpack.c.h.b16 %v672
    %v1046 = vunpack.c.l.b16 %v673
    %v1047 = vunpack.c.h.b16 %v673
    %v1048 = vunpack.c.l.b16 %v674
    %v1049 = vunpack.c.h.b16 %v674
    %v1050 = vunpack.c.l.b16 %v675
    %v1051 = vunpack.c.h.b16 %v675
    %v1052 = vunpack.c.l.b16 %v676
    %v1053 = vunpack.c.h.b16 %v676
    %v1054 = vunpack.c.l.b16 %v677
    %v1055 = vunpack.c.h.b16 %v677
    %v1056 = vunpack.c.l.b16 %v678
    %v1057 = vunpack.c.h.b16 %v678
    %v1058 = vunpack.c.l.b16 %v679
    %v1059 = vunpack.c.h.b16 %v679
    %v1060 = vunpack.c.l.b16 %v680
    %v1061 = vunpack.c.h.b16 %v680
    %v1062 = vunpack.c.l.b16 %v681
    %v1063 = vunpack.c.h.b16 %v681
    %v1064 = vunpack.c.l.b16 %v682
    %v1065 = vunpack.c.h.b16 %v682
    %v1066 = vunpack.c.l.b16 %v683
    %v1067 = vunpack.c.h.b16 %v683
    %v1068 = vunpack.c.l.b16 %v684
    %v1069 = vunpack.c.h.b16 %v684
    %v1070 = vunpack.c.l.b16 %v685
    %v1071 = vunpack.c.h.b16 %v685
    %v1072 = vunpack.c.l.b16 %v686
    %v1073 = vunpack.c.h.b16 %v686
    %v1074 = vunpack.c.l.b16 %v687
    %v1075 = vunpack.c.h.b16 %v687
    %v1076 = vunpack.c.l.b16 %v688
    %v1077 = vunpack.c.h.b16 %v688
    %v1078 = vunpack.c.l.b16 %v689
    %v1079 = vunpack.c.h.b16 %v689
    %v1080 = vunpack.c.l.b16 %v690
    %v1081 = vunpack.c.h.b16 %v690
    %v1082 = vunpack.c.l.b16 %v691
    %v1083 = vunpack.c.h.b16 %v691
    %v1084 = vunpack.c.l.b16 %v692
    %v1085 = vunpack.c.h.b16 %v692
    %v1086 = vunpack.c.l.b16 %v693
    %v1087 = vunpack.c.h.b16 %v693
    %v1088 = vunpack.c.l.b16 %v694
    %v1089 = vunpack.c.h.b16 %v694
    %v1090 = vunpack.c.l.b16 %v695
    %v1091 = vunpack.c.h.b16 %v695
    %v1092 = vunpack.c.l.b16 %v696
    %v1093 = vunpack.c.h.b16 %v696
    %v1094 = vunpack.c.l.b16 %v697
    %v1095 = vunpack.c.h.b16 %v697
    %v1096 = vunpack.c.l.b16 %v698
    %v1097 = vunpack.c.h.b16 %v698
    %v1098 = vunpack.c.l.b16 %v699
    %v1099 = vunpack.c.h.b16 %v699
    %v1100 = vunpack.c.l.b16 %v700
    %v1101 = vunpack.c.h.b16 %v700
    %v1102 = vunpack.c.l.b16 %v701
    %v1103 = vunpack.c.h.b16 %v701
    %v1104 = vunpack.c.l.b16 %v702
    %v1105 = vunpack.c.h.b16 %v702
    %v1106 = vunpack.c.l.b16 %v703
    %v1107 = vunpack.c.h.b16 %v703
    %v1108 = vunpack.c.l.b16 %v704
    %v1109 = vunpack.c.h.b16 %v704
    %v1110 = vunpack.c.l.b16 %v705
    %v1111 = vunpack.c.h.b16 %v705
    %v1112 = vpack.c.b16 %v860, %v856
    %v1113 = vpack.c.b16 %v861, %v857
    %v1114 = vpack.c.b16 %v862, %v858
    %v1115 = vpack.c.b16 %v863, %v859
    %v1116 = vpack.c.b16 %v868, %v864
    %v1117 = vpack.c.b16 %v869, %v865
    %v1118 = vpack.c.b16 %v870, %v866
    %v1119 = vpack.c.b16 %v871, %v867
    %v1120 = vpack.c.b16 %v876, %v872
    %v1121 = vpack.c.b16 %v877, %v873
    %v1122 = vpack.c.b16 %v878, %v874
    %v1123 = vpack.c.b16 %v879, %v875
    %v1124 = vpack.c.b16 %v884, %v880
    %v1125 = vpack.c.b16 %v885, %v881
    %v1126 = vpack.c.b16 %v886, %v882
    %v1127 = vpack.c.b16 %v887, %v883
    %v1128 = vpack.c.b16 %v892, %v888
    %v1129 = vpack.c.b16 %v893, %v889
    %v1130 = vpack.c.b16 %v894, %v890
    %v1131 = vpack.c.b16 %v895, %v891
    %v1132 = vpack.c.b16 %v900, %v896
    %v1133 = vpack.c.b16 %v901, %v897
    %v1134 = vpack.c.b16 %v902, %v898
    %v1135 = vpack.c.b16 %v903, %v899
    %v1136 = vpack.c.b16 %v908, %v904
    %v1137 = vpack.c.b16 %v909, %v905
    %v1138 = vpack.c.b16 %v910, %v906
    %v1139 = vpack.c.b16 %v911, %v907
    %v1140 = vpack.c.b16 %v916, %v912
    %v1141 = vpack.c.b16 %v917, %v913
    %v1142 = vpack.c.b16 %v918, %v914
    %v1143 = vpack.c.b16 %v919, %v915
    %v1144 = vpack.c.b16 %v924, %v920
    %v1145 = vpack.c.b16 %v925, %v921
    %v1146 = vpack.c.b16 %v926, %v922
    %v1147 = vpack.c.b16 %v927, %v923
    %v1148 = vpack.c.b16 %v932, %v928
    %v1149 = vpack.c.b16 %v933, %v929
    %v1150 = vpack.c.b16 %v934, %v930
    %v1151 = vpack.c.b16 %v935, %v931
    %v1152 = vpack.c.b16 %v940, %v936
    %v1153 = vpack.c.b16 %v941, %v937
    %v1154 = vpack.c.b16 %v942, %v938
    %v1155 = vpack.c.b16 %v943, %v939
    %v1156 = vpack.c.b16 %v948, %v944
    %v1157 = vpack.c.b16 %v949, %v945
    %v1158 = vpack.c.b16 %v950, %v946
    %v1159 = vpack.c.b16 %v951, %v947
    %v1160 = vpack.c.b16 %v956, %v952
    %v1161 = vpack.c.b16 %v957, %v953
    %v1162 = vpack.c.b16 %v958, %v954
    %v1163 = vpack.c.b16 %v959, %v955
    %v1164 = vpack.c.b16 %v964, %v960
    %v1165 = vpack.c.b16 %v965, %v961
    %v1166 = vpack.c.b16 %v966, %v962
    %v1167 = vpack.c.b16 %v967, %v963
    %v1168 = vpack.c.b16 %v972, %v968
    %v1169 = vpack.c.b16 %v973, %v969
    %v1170 = vpack.c.b16 %v974, %v970
    %v1171 = vpack.c.b16 %v975, %v971
    %v1172 = vpack.c.b16 %v980, %v976
    %v1173 = vpack.c.b16 %v981, %v977
    %v1174 = vpack.c.b16 %v982, %v978
    %v1175 = vpack.c.b16 %v983, %v979
    %v1176 = vpack.c.b16 %v988, %v984
    %v1177 = vpack.c.b16 %v989, %v985
    %v1178 = vpack.c.b16 %v990, %v986
    %v1179 = vpack.c.b16 %v991, %v987
    %v1180 = vpack.c.b16 %v996, %v992
    %v1181 = vpack.c.b16 %v997, %v993
    %v1182 = vpack.c.b16 %v998, %v994
    %v1183 = vpack.c.b16 %v999, %v995
    %v1184 = vpack.c.b16 %v1004, %v1000
    %v1185 = vpack.c.b16 %v1005, %v1001
    %v1186 = vpack.c.b16 %v1006, %v1002
    %v1187 = vpack.c.b16 %v1007, %v1003
    %v1188 = vpack.c.b16 %v1012, %v1008
    %v1189 = vpack.c.b16 %v1013, %v1009
    %v1190 = vpack.c.b16 %v1014, %v1010
    %v1191 = vpack.c.b16 %v1015, %v1011
    %v1192 = vpack.c.b16 %v1020, %v1016
    %v1193 = vpack.c.b16 %v1021, %v1017
    %v1194 = vpack.c.b16 %v1022, %v1018
    %v1195 = vpack.c.b16 %v1023, %v1019
    %v1196 = vpack.c.b16 %v1028, %v1024
    %v1197 = vpack.c.b16 %v1029, %v1025
    %v1198 = vpack.c.b16 %v1030, %v1026
    %v1199 = vpack.c.b16 %v1031, %v1027
    %v1200 = vpack.c.b16 %v1036, %v1032
    %v1201 = vpack.c.b16 %v1037, %v1033
    %v1202 = vpack.c.b16 %v1038, %v1034
    %v1203 = vpack.c.b16 %v1039, %v1035
    %v1204 = vpack.c.b16 %v1044, %v1040
    %v1205 = vpack.c.b16 %v1045, %v1041
    %v1206 = vpack.c.b16 %v1046, %v1042
    %v1207 = vpack.c.b16 %v1047, %v1043
    %v1208 = vpack.c.b16 %v1052, %v1048
    %v1209 = vpack.c.b16 %v1053, %v1049
    %v1210 = vpack.c.b16 %v1054, %v1050
    %v1211 = vpack.c.b16 %v1055, %v1051
    %v1212 = vpack.c.b16 %v1060, %v1056
    %v1213 = vpack.c.b16 %v1061, %v1057
    %v1214 = vpack.c.b16 %v1062, %v1058
    %v1215 = vpack.c.b16 %v1063, %v1059
    %v1216 = vpack.c.b16 %v1068, %v1064
    %v1217 = vpack.c.b16 %v1069, %v1065
    %v1218 = vpack.c.b16 %v1070, %v1066
    %v1219 = vpack.c.b16 %v1071, %v1067
    %v1220 = vpack.c.b16 %v1076, %v1072
    %v1221 = vpack.c.b16 %v1077, %v1073
    %v1222 = vpack.c.b16 %v1078, %v1074
    %v1223 = vpack.c.b16 %v1079, %v1075
    %v1224 = vpack.c.b16 %v1084, %v1080
    %v1225 = vpack.c.b16 %v1085, %v1081
    %v1226 = vpack.c.b16 %v1086, %v1082
    %v1227 = vpack.c.b16 %v1087, %v1083
    %v1228 = vpack.c.b16 %v1092, %v1088
    %v1229 = vpack.c.b16 %v1093, %v1089
    %v1230 = vpack.c.b16 %v1094, %v1090
    %v1231 = vpack.c.b16 %v1095, %v1091
    %v1232 = vpack.c.b16 %v1100, %v1096
    %v1233 = vpack.c.b16 %v1101, %v1097
    %v1234 = vpack.c.b16 %v1102, %v1098
    %v1235 = vpack.c.b16 %v1103, %v1099
    %v1236 = vpack.c.b16 %v1108, %v1104
    %v1237 = vpack.c.b16 %v1109, %v1105
    %v1238 = vpack.c.b16 %v1110, %v1106
    %v1239 = vpack.c.b16 %v1111, %v1107
    %1368 = vmatprep.subr.bf16.mxu0 %v1113
    %1369 = vmatpush1.bf16.msra.mxu0 %v1112
    %1370 = vmatprep.subr.bf16.mxu0 %v1117
    %1371 = vmatpush1.bf16.msra.mxu0 %v1116
    %1372 = vmatprep.subr.bf16.mxu0 %v1121
    %1373 = vmatpush1.bf16.msra.mxu0 %v1120
    %1374 = vmatprep.subr.bf16.mxu0 %v1125
    %1375 = vmatpush1.bf16.msra.mxu0 %v1124
    %1376 = vmatprep.subr.bf16.mxu0 %v1129
    %1377 = vmatpush1.bf16.msra.mxu0 %v1128
    %1378 = vmatprep.subr.bf16.mxu0 %v1133
    %1379 = vmatpush1.bf16.msra.mxu0 %v1132
    %1380 = vmatprep.subr.bf16.mxu0 %v1137
    %1381 = vmatpush1.bf16.msra.mxu0 %v1136
    %1382 = vmatprep.subr.bf16.mxu0 %v1141
    %1383 = vmatpush1.bf16.msra.mxu0 %v1140
    %1384 = vmatprep.subr.bf16.mxu0 %v1145
    %1385 = vmatpush1.bf16.msra.mxu0 %v1144
    %1386 = vmatprep.subr.bf16.mxu0 %v1149
    %1387 = vmatpush1.bf16.msra.mxu0 %v1148
    %1388 = vmatprep.subr.bf16.mxu0 %v1153
    %1389 = vmatpush1.bf16.msra.mxu0 %v1152
    %1390 = vmatprep.subr.bf16.mxu0 %v1157
    %1391 = vmatpush1.bf16.msra.mxu0 %v1156
    %1392 = vmatprep.subr.bf16.mxu0 %v1161
    %1393 = vmatpush1.bf16.msra.mxu0 %v1160
    %1394 = vmatprep.subr.bf16.mxu0 %v1165
    %1395 = vmatpush1.bf16.msra.mxu0 %v1164
    %1396 = vmatprep.subr.bf16.mxu0 %v1169
    %1397 = vmatpush1.bf16.msra.mxu0 %v1168
    %1398 = vmatprep.subr.bf16.mxu0 %v1173
    %1399 = vmatpush1.bf16.msra.mxu0 %v1172
    %1400 = vmatprep.mubr.bf16.mxu0 %v575
    %1401 = vmatmul.mubr.bf16.gmra.mrb[0].mxu0 %v574
    %v1402 = vpop.f32.mrb[0].mxu0
    %v1403 = vadd.f32 %v711, %v1402
    %v1404 = vpop.f32.mrb[0].mxu0
    %v1405 = vadd.f32 %v715, %v1404
    %v1406 = vpop.f32.mrb[0].mxu0
    %v1407 = vpop.f32.mrb[0].mxu0
    %1408 = vdwg.mxu0
    %1409 = vmatprep.subr.bf16.mxu0 %v1177
    %1410 = vmatpush1.bf16.msra.mxu0 %v1176
    %1411 = vmatprep.subr.bf16.mxu0 %v1181
    %1412 = vmatpush1.bf16.msra.mxu0 %v1180
    %1413 = vmatprep.subr.bf16.mxu0 %v1185
    %1414 = vmatpush1.bf16.msra.mxu0 %v1184
    %1415 = vmatprep.subr.bf16.mxu0 %v1189
    %1416 = vmatpush1.bf16.msra.mxu0 %v1188
    %1417 = vmatprep.subr.bf16.mxu0 %v1193
    %1418 = vmatpush1.bf16.msra.mxu0 %v1192
    %1419 = vmatprep.subr.bf16.mxu0 %v1197
    %1420 = vmatpush1.bf16.msra.mxu0 %v1196
    %1421 = vmatprep.subr.bf16.mxu0 %v1201
    %1422 = vmatpush1.bf16.msra.mxu0 %v1200
    %1423 = vmatprep.subr.bf16.mxu0 %v1205
    %1424 = vmatpush1.bf16.msra.mxu0 %v1204
    %1425 = vmatprep.subr.bf16.mxu0 %v1209
    %1426 = vmatpush1.bf16.msra.mxu0 %v1208
    %1427 = vmatprep.subr.bf16.mxu0 %v1213
    %1428 = vmatpush1.bf16.msra.mxu0 %v1212
    %1429 = vmatprep.subr.bf16.mxu0 %v1217
    %1430 = vmatpush1.bf16.msra.mxu0 %v1216
    %1431 = vmatprep.subr.bf16.mxu0 %v1221
    %1432 = vmatpush1.bf16.msra.mxu0 %v1220
    %1433 = vmatprep.subr.bf16.mxu0 %v1225
    %1434 = vmatpush1.bf16.msra.mxu0 %v1224
    %1435 = vmatprep.subr.bf16.mxu0 %v1229
    %1436 = vmatpush1.bf16.msra.mxu0 %v1228
    %1437 = vmatprep.subr.bf16.mxu0 %v1233
    %1438 = vmatpush1.bf16.msra.mxu0 %v1232
    %1439 = vmatprep.subr.bf16.mxu0 %v1237
    %1440 = vmatpush1.bf16.msra.mxu0 %v1236
    %1441 = vmatprep.mubr.bf16.mxu0 %v577
    %1442 = vmatmul.mubr.bf16.gmra.mrb[0].mxu0 %v576
    %v1443 = vpop.f32.mrb[0].mxu0
    %v1444 = vadd.f32 %v1403, %v1443
    %v1445 = vpop.f32.mrb[0].mxu0
    %v1446 = vadd.f32 %v1405, %v1445
    %v1447 = vpop.f32.mrb[0].mxu0
    %v1448 = vpop.f32.mrb[0].mxu0
    %1449 = vdwg.mxu0
    %1450 = vmatprep.subr.bf16.mxu0 %v1115
    %1451 = vmatpush1.bf16.msra.mxu0 %v1114
    %1452 = vmatprep.subr.bf16.mxu0 %v1119
    %1453 = vmatpush1.bf16.msra.mxu0 %v1118
    %1454 = vmatprep.subr.bf16.mxu0 %v1123
    %1455 = vmatpush1.bf16.msra.mxu0 %v1122
    %1456 = vmatprep.subr.bf16.mxu0 %v1127
    %1457 = vmatpush1.bf16.msra.mxu0 %v1126
    %1458 = vmatprep.subr.bf16.mxu0 %v1131
    %1459 = vmatpush1.bf16.msra.mxu0 %v1130
    %1460 = vmatprep.subr.bf16.mxu0 %v1135
    %1461 = vmatpush1.bf16.msra.mxu0 %v1134
    %1462 = vmatprep.subr.bf16.mxu0 %v1139
    %1463 = vmatpush1.bf16.msra.mxu0 %v1138
    %1464 = vmatprep.subr.bf16.mxu0 %v1143
    %1465 = vmatpush1.bf16.msra.mxu0 %v1142
    %1466 = vmatprep.subr.bf16.mxu0 %v1147
    %1467 = vmatpush1.bf16.msra.mxu0 %v1146
    %1468 = vmatprep.subr.bf16.mxu0 %v1151
    %1469 = vmatpush1.bf16.msra.mxu0 %v1150
    %1470 = vmatprep.subr.bf16.mxu0 %v1155
    %1471 = vmatpush1.bf16.msra.mxu0 %v1154
    %1472 = vmatprep.subr.bf16.mxu0 %v1159
    %1473 = vmatpush1.bf16.msra.mxu0 %v1158
    %1474 = vmatprep.subr.bf16.mxu0 %v1163
    %1475 = vmatpush1.bf16.msra.mxu0 %v1162
    %1476 = vmatprep.subr.bf16.mxu0 %v1167
    %1477 = vmatpush1.bf16.msra.mxu0 %v1166
    %1478 = vmatprep.subr.bf16.mxu0 %v1171
    %1479 = vmatpush1.bf16.msra.mxu0 %v1170
    %1480 = vmatprep.subr.bf16.mxu0 %v1175
    %1481 = vmatpush1.bf16.msra.mxu0 %v1174
    %1482 = vmatprep.mubr.bf16.mxu0 %v575
    %1483 = vmatmul.mubr.bf16.gmra.mrb[0].mxu0 %v574
    %v1484 = vpop.f32.mrb[0].mxu0
    %v1485 = vadd.f32 %v719, %v1484
    %v1486 = vpop.f32.mrb[0].mxu0
    %v1487 = vadd.f32 %v723, %v1486
    %v1488 = vpop.f32.mrb[0].mxu0
    %v1489 = vpop.f32.mrb[0].mxu0
    %1490 = vdwg.mxu0
    %1491 = vmatprep.subr.bf16.mxu0 %v1179
    %1492 = vmatpush1.bf16.msra.mxu0 %v1178
    %1493 = vmatprep.subr.bf16.mxu0 %v1183
    %1494 = vmatpush1.bf16.msra.mxu0 %v1182
    %1495 = vmatprep.subr.bf16.mxu0 %v1187
    %1496 = vmatpush1.bf16.msra.mxu0 %v1186
    %1497 = vmatprep.subr.bf16.mxu0 %v1191
    %1498 = vmatpush1.bf16.msra.mxu0 %v1190
    %1499 = vmatprep.subr.bf16.mxu0 %v1195
    %1500 = vmatpush1.bf16.msra.mxu0 %v1194
    %1501 = vmatprep.subr.bf16.mxu0 %v1199
    %1502 = vmatpush1.bf16.msra.mxu0 %v1198
    %1503 = vmatprep.subr.bf16.mxu0 %v1203
    %1504 = vmatpush1.bf16.msra.mxu0 %v1202
    %1505 = vmatprep.subr.bf16.mxu0 %v1207
    %1506 = vmatpush1.bf16.msra.mxu0 %v1206
    %1507 = vmatprep.subr.bf16.mxu0 %v1211
    %1508 = vmatpush1.bf16.msra.mxu0 %v1210
    %1509 = vmatprep.subr.bf16.mxu0 %v1215
    %1510 = vmatpush1.bf16.msra.mxu0 %v1214
    %1511 = vmatprep.subr.bf16.mxu0 %v1219
    %1512 = vmatpush1.bf16.msra.mxu0 %v1218
    %1513 = vmatprep.subr.bf16.mxu0 %v1223
    %1514 = vmatpush1.bf16.msra.mxu0 %v1222
    %1515 = vmatprep.subr.bf16.mxu0 %v1227
    %1516 = vmatpush1.bf16.msra.mxu0 %v1226
    %1517 = vmatprep.subr.bf16.mxu0 %v1231
    %1518 = vmatpush1.bf16.msra.mxu0 %v1230
    %1519 = vmatprep.subr.bf16.mxu0 %v1235
    %1520 = vmatpush1.bf16.msra.mxu0 %v1234
    %1521 = vmatprep.subr.bf16.mxu0 %v1239
    %1522 = vmatpush1.bf16.msra.mxu0 %v1238
    %1523 = vmatprep.mubr.bf16.mxu0 %v577
    %1524 = vmatmul.mubr.bf16.gmra.mrb[0].mxu0 %v576
    %v1525 = vpop.f32.mrb[0].mxu0
    %v1526 = vadd.f32 %v1485, %v1525
    %v1527 = vpop.f32.mrb[0].mxu0
    %v1528 = vadd.f32 %v1487, %v1527
    %v1529 = vpop.f32.mrb[0].mxu0
    %v1530 = vpop.f32.mrb[0].mxu0
    %1531 = vdwg.mxu0
    %v1532 = vmax.f32 %v1444, 0.0
    %v1533 = vmax.f32 %v1446, 0.0
    %v1534 = vmax.f32 %v1526, 0.0
    %v1535 = vmax.f32 %v1528, 0.0
    %v1536 = vpack.c.bf16 %v1532, %v1532
    %v1537 = vpack.c.bf16 %v1533, %v1533
    %v1538 = vpack.c.bf16 %v1534, %v1534
    %v1539 = vpack.c.bf16 %v1535, %v1535
    %v1540 = vld [vmem:[#allocation6] sm:$0xf]
    %v1541 = vld [vmem:[#allocation6 + $0x4] sm:$0xf]
    %v1542 = vld [vmem:[#allocation6 + $0x8] sm:$0xf]
    %v1543 = vld [vmem:[#allocation6 + $0xc] sm:$0xf]
    %v1544 = vld [vmem:[#allocation6 + $0x10] sm:$0xf]
    %v1545 = vld [vmem:[#allocation6 + $0x14] sm:$0xf]
    %v1546 = vld [vmem:[#allocation6 + $0x18] sm:$0xf]
    %v1547 = vld [vmem:[#allocation6 + $0x1c] sm:$0xf]
    %v1548 = vld [vmem:[#allocation6 + $0x20] sm:$0xf]
    %v1549 = vld [vmem:[#allocation6 + $0x24] sm:$0xf]
    %v1550 = vld [vmem:[#allocation6 + $0x28] sm:$0xf]
    %v1551 = vld [vmem:[#allocation6 + $0x2c] sm:$0xf]
    %v1552 = vld [vmem:[#allocation6 + $0x30] sm:$0xf]
    %v1553 = vld [vmem:[#allocation6 + $0x34] sm:$0xf]
    %v1554 = vld [vmem:[#allocation6 + $0x38] sm:$0xf]
    %v1555 = vld [vmem:[#allocation6 + $0x3c] sm:$0xf]
    %v1556 = vld [vmem:[#allocation6 + $0x40] sm:$0xf]
    %v1557 = vld [vmem:[#allocation6 + $0x44] sm:$0xf]
    %v1558 = vld [vmem:[#allocation6 + $0x48] sm:$0xf]
    %v1559 = vld [vmem:[#allocation6 + $0x4c] sm:$0xf]
    %v1560 = vld [vmem:[#allocation6 + $0x50] sm:$0xf]
    %v1561 = vld [vmem:[#allocation6 + $0x54] sm:$0xf]
    %v1562 = vld [vmem:[#allocation6 + $0x58] sm:$0xf]
    %v1563 = vld [vmem:[#allocation6 + $0x5c] sm:$0xf]
    %v1564 = vld [vmem:[#allocation6 + $0x60] sm:$0xf]
    %v1565 = vld [vmem:[#allocation6 + $0x64] sm:$0xf]
    %v1566 = vld [vmem:[#allocation6 + $0x68] sm:$0xf]
    %v1567 = vld [vmem:[#allocation6 + $0x6c] sm:$0xf]
    %v1568 = vld [vmem:[#allocation6 + $0x70] sm:$0xf]
    %v1569 = vld [vmem:[#allocation6 + $0x74] sm:$0xf]
    %v1570 = vld [vmem:[#allocation6 + $0x78] sm:$0xf]
    %v1571 = vld [vmem:[#allocation6 + $0x7c] sm:$0xf]
    %v1572 = vld [vmem:[#allocation6 + $0x80] sm:$0xf]
    %v1573 = vld [vmem:[#allocation6 + $0x84] sm:$0xf]
    %v1574 = vld [vmem:[#allocation6 + $0x88] sm:$0xf]
    %v1575 = vld [vmem:[#allocation6 + $0x8c] sm:$0xf]
    %v1576 = vld [vmem:[#allocation6 + $0x90] sm:$0xf]
    %v1577 = vld [vmem:[#allocation6 + $0x94] sm:$0xf]
    %v1578 = vld [vmem:[#allocation6 + $0x98] sm:$0xf]
    %v1579 = vld [vmem:[#allocation6 + $0x9c] sm:$0xf]
    %v1580 = vld [vmem:[#allocation6 + $0xa0] sm:$0xf]
    %v1581 = vld [vmem:[#allocation6 + $0xa4] sm:$0xf]
    %v1582 = vld [vmem:[#allocation6 + $0xa8] sm:$0xf]
    %v1583 = vld [vmem:[#allocation6 + $0xac] sm:$0xf]
    %v1584 = vld [vmem:[#allocation6 + $0xb0] sm:$0xf]
    %v1585 = vld [vmem:[#allocation6 + $0xb4] sm:$0xf]
    %v1586 = vld [vmem:[#allocation6 + $0xb8] sm:$0xf]
    %v1587 = vld [vmem:[#allocation6 + $0xbc] sm:$0xf]
    %v1588 = vld [vmem:[#allocation6 + $0xc0] sm:$0xf]
    %v1589 = vld [vmem:[#allocation6 + $0xc4] sm:$0xf]
    %v1590 = vld [vmem:[#allocation6 + $0xc8] sm:$0xf]
    %v1591 = vld [vmem:[#allocation6 + $0xcc] sm:$0xf]
    %v1592 = vld [vmem:[#allocation6 + $0xd0] sm:$0xf]
    %v1593 = vld [vmem:[#allocation6 + $0xd4] sm:$0xf]
    %v1594 = vld [vmem:[#allocation6 + $0xd8] sm:$0xf]
    %v1595 = vld [vmem:[#allocation6 + $0xdc] sm:$0xf]
    %v1596 = vld [vmem:[#allocation6 + $0xe0] sm:$0xf]
    %v1597 = vld [vmem:[#allocation6 + $0xe4] sm:$0xf]
    %v1598 = vld [vmem:[#allocation6 + $0xe8] sm:$0xf]
    %v1599 = vld [vmem:[#allocation6 + $0xec] sm:$0xf]
    %v1600 = vld [vmem:[#allocation6 + $0xf0] sm:$0xf]
    %v1601 = vld [vmem:[#allocation6 + $0xf4] sm:$0xf]
    %v1602 = vld [vmem:[#allocation6 + $0xf8] sm:$0xf]
    %v1603 = vld [vmem:[#allocation6 + $0xfc] sm:$0xf]
    %v1604 = vld [vmem:[%s6] sm:$0x1]
    %v1606 = vlaneseq
    %v1607 = vshrl.u32 %v1606, 7
    %v1608 = vsub.s32 0, %v1607
    %v1609 = vrot.slane %v1604, %v1608
    %v1675 = vunpack.c.l.b16 %v1540
    %v1676 = vunpack.c.l.b16 %v1541
    %v1677 = vunpack.c.l.b16 %v1542
    %v1678 = vunpack.c.l.b16 %v1543
    %v1679 = vunpack.c.l.b16 %v1544
    %v1680 = vunpack.c.l.b16 %v1545
    %v1681 = vunpack.c.l.b16 %v1546
    %v1682 = vunpack.c.l.b16 %v1547
    %v1683 = vunpack.c.l.b16 %v1548
    %v1684 = vunpack.c.l.b16 %v1549
    %v1685 = vunpack.c.l.b16 %v1550
    %v1686 = vunpack.c.l.b16 %v1551
    %v1687 = vunpack.c.l.b16 %v1552
    %v1688 = vunpack.c.l.b16 %v1553
    %v1689 = vunpack.c.l.b16 %v1554
    %v1690 = vunpack.c.l.b16 %v1555
    %v1691 = vunpack.c.l.b16 %v1556
    %v1692 = vunpack.c.l.b16 %v1557
    %v1693 = vunpack.c.l.b16 %v1558
    %v1694 = vunpack.c.l.b16 %v1559
    %v1695 = vunpack.c.l.b16 %v1560
    %v1696 = vunpack.c.l.b16 %v1561
    %v1697 = vunpack.c.l.b16 %v1562
    %v1698 = vunpack.c.l.b16 %v1563
    %v1699 = vunpack.c.l.b16 %v1564
    %v1700 = vunpack.c.l.b16 %v1565
    %v1701 = vunpack.c.l.b16 %v1566
    %v1702 = vunpack.c.l.b16 %v1567
    %v1703 = vunpack.c.l.b16 %v1568
    %v1704 = vunpack.c.l.b16 %v1569
    %v1705 = vunpack.c.l.b16 %v1570
    %v1706 = vunpack.c.l.b16 %v1571
    %v1707 = vunpack.c.l.b16 %v1572
    %v1708 = vunpack.c.l.b16 %v1573
    %v1709 = vunpack.c.l.b16 %v1574
    %v1710 = vunpack.c.l.b16 %v1575
    %v1711 = vunpack.c.l.b16 %v1576
    %v1712 = vunpack.c.l.b16 %v1577
    %v1713 = vunpack.c.l.b16 %v1578
    %v1714 = vunpack.c.l.b16 %v1579
    %v1715 = vunpack.c.l.b16 %v1580
    %v1716 = vunpack.c.l.b16 %v1581
    %v1717 = vunpack.c.l.b16 %v1582
    %v1718 = vunpack.c.l.b16 %v1583
    %v1719 = vunpack.c.l.b16 %v1584
    %v1720 = vunpack.c.l.b16 %v1585
    %v1721 = vunpack.c.l.b16 %v1586
    %v1722 = vunpack.c.l.b16 %v1587
    %v1723 = vunpack.c.l.b16 %v1588
    %v1724 = vunpack.c.l.b16 %v1589
    %v1725 = vunpack.c.l.b16 %v1590
    %v1726 = vunpack.c.l.b16 %v1591
    %v1727 = vunpack.c.l.b16 %v1592
    %v1728 = vunpack.c.l.b16 %v1593
    %v1729 = vunpack.c.l.b16 %v1594
    %v1730 = vunpack.c.l.b16 %v1595
    %v1731 = vunpack.c.l.b16 %v1596
    %v1732 = vunpack.c.l.b16 %v1597
    %v1733 = vunpack.c.l.b16 %v1598
    %v1734 = vunpack.c.l.b16 %v1599
    %v1735 = vunpack.c.l.b16 %v1600
    %v1736 = vunpack.c.l.b16 %v1601
    %v1737 = vunpack.c.l.b16 %v1602
    %v1738 = vunpack.c.l.b16 %v1603
    %v1739 = vpack.c.b16 %v1676, %v1675
    %v1740 = vpack.c.b16 %v1678, %v1677
    %v1741 = vpack.c.b16 %v1680, %v1679
    %v1742 = vpack.c.b16 %v1682, %v1681
    %v1743 = vpack.c.b16 %v1684, %v1683
    %v1744 = vpack.c.b16 %v1686, %v1685
    %v1745 = vpack.c.b16 %v1688, %v1687
    %v1746 = vpack.c.b16 %v1690, %v1689
    %v1747 = vpack.c.b16 %v1692, %v1691
    %v1748 = vpack.c.b16 %v1694, %v1693
    %v1749 = vpack.c.b16 %v1696, %v1695
    %v1750 = vpack.c.b16 %v1698, %v1697
    %v1751 = vpack.c.b16 %v1700, %v1699
    %v1752 = vpack.c.b16 %v1702, %v1701
    %v1753 = vpack.c.b16 %v1704, %v1703
    %v1754 = vpack.c.b16 %v1706, %v1705
    %v1755 = vpack.c.b16 %v1708, %v1707
    %v1756 = vpack.c.b16 %v1710, %v1709
    %v1757 = vpack.c.b16 %v1712, %v1711
    %v1758 = vpack.c.b16 %v1714, %v1713
    %v1759 = vpack.c.b16 %v1716, %v1715
    %v1760 = vpack.c.b16 %v1718, %v1717
    %v1761 = vpack.c.b16 %v1720, %v1719
    %v1762 = vpack.c.b16 %v1722, %v1721
    %v1763 = vpack.c.b16 %v1724, %v1723
    %v1764 = vpack.c.b16 %v1726, %v1725
    %v1765 = vpack.c.b16 %v1728, %v1727
    %v1766 = vpack.c.b16 %v1730, %v1729
    %v1767 = vpack.c.b16 %v1732, %v1731
    %v1768 = vpack.c.b16 %v1734, %v1733
    %v1769 = vpack.c.b16 %v1736, %v1735
    %v1770 = vpack.c.b16 %v1738, %v1737
    %1803 = vmatprep.subr.bf16.mxu0 0
    %1804 = vmatpush1.bf16.msra.mxu0 %v1739
    %1805 = vmatprep.subr.bf16.mxu0 0
    %1806 = vmatpush1.bf16.msra.mxu0 %v1740
    %1807 = vmatprep.subr.bf16.mxu0 0
    %1808 = vmatpush1.bf16.msra.mxu0 %v1741
    %1809 = vmatprep.subr.bf16.mxu0 0
    %1810 = vmatpush1.bf16.msra.mxu0 %v1742
    %1811 = vmatprep.subr.bf16.mxu0 0
    %1812 = vmatpush1.bf16.msra.mxu0 %v1743
    %1813 = vmatprep.subr.bf16.mxu0 0
    %1814 = vmatpush1.bf16.msra.mxu0 %v1744
    %1815 = vmatprep.subr.bf16.mxu0 0
    %1816 = vmatpush1.bf16.msra.mxu0 %v1745
    %1817 = vmatprep.subr.bf16.mxu0 0
    %1818 = vmatpush1.bf16.msra.mxu0 %v1746
    %1819 = vmatprep.subr.bf16.mxu0 0
    %1820 = vmatpush1.bf16.msra.mxu0 %v1747
    %1821 = vmatprep.subr.bf16.mxu0 0
    %1822 = vmatpush1.bf16.msra.mxu0 %v1748
    %1823 = vmatprep.subr.bf16.mxu0 0
    %1824 = vmatpush1.bf16.msra.mxu0 %v1749
    %1825 = vmatprep.subr.bf16.mxu0 0
    %1826 = vmatpush1.bf16.msra.mxu0 %v1750
    %1827 = vmatprep.subr.bf16.mxu0 0
    %1828 = vmatpush1.bf16.msra.mxu0 %v1751
    %1829 = vmatprep.subr.bf16.mxu0 0
    %1830 = vmatpush1.bf16.msra.mxu0 %v1752
    %1831 = vmatprep.subr.bf16.mxu0 0
    %1832 = vmatpush1.bf16.msra.mxu0 %v1753
    %1833 = vmatprep.subr.bf16.mxu0 0
    %1834 = vmatpush1.bf16.msra.mxu0 %v1754
    %1835 = vmatprep.mubr.bf16.mxu0 %v1537
    %1836 = vmatmul.mubr.bf16.gmra.mrb[0].mxu0 %v1536
    %v1837 = vpop.f32.mrb[0].mxu0
    %v1838 = vadd.f32 %v1609, %v1837
    %v1839 = vpop.f32.mrb[0].mxu0
    %v1840 = vpop.f32.mrb[0].mxu0
    %v1841 = vpop.f32.mrb[0].mxu0
    %1842 = vdwg.mxu0
    %1843 = vmatprep.subr.bf16.mxu0 0
    %1844 = vmatpush1.bf16.msra.mxu0 %v1755
    %1845 = vmatprep.subr.bf16.mxu0 0
    %1846 = vmatpush1.bf16.msra.mxu0 %v1756
    %1847 = vmatprep.subr.bf16.mxu0 0
    %1848 = vmatpush1.bf16.msra.mxu0 %v1757
    %1849 = vmatprep.subr.bf16.mxu0 0
    %1850 = vmatpush1.bf16.msra.mxu0 %v1758
    %1851 = vmatprep.subr.bf16.mxu0 0
    %1852 = vmatpush1.bf16.msra.mxu0 %v1759
    %1853 = vmatprep.subr.bf16.mxu0 0
    %1854 = vmatpush1.bf16.msra.mxu0 %v1760
    %1855 = vmatprep.subr.bf16.mxu0 0
    %1856 = vmatpush1.bf16.msra.mxu0 %v1761
    %1857 = vmatprep.subr.bf16.mxu0 0
    %1858 = vmatpush1.bf16.msra.mxu0 %v1762
    %1859 = vmatprep.subr.bf16.mxu0 0
    %1860 = vmatpush1.bf16.msra.mxu0 %v1763
    %1861 = vmatprep.subr.bf16.mxu0 0
    %1862 = vmatpush1.bf16.msra.mxu0 %v1764
    %1863 = vmatprep.subr.bf16.mxu0 0
    %1864 = vmatpush1.bf16.msra.mxu0 %v1765
    %1865 = vmatprep.subr.bf16.mxu0 0
    %1866 = vmatpush1.bf16.msra.mxu0 %v1766
    %1867 = vmatprep.subr.bf16.mxu0 0
    %1868 = vmatpush1.bf16.msra.mxu0 %v1767
    %1869 = vmatprep.subr.bf16.mxu0 0
    %1870 = vmatpush1.bf16.msra.mxu0 %v1768
    %1871 = vmatprep.subr.bf16.mxu0 0
    %1872 = vmatpush1.bf16.msra.mxu0 %v1769
    %1873 = vmatprep.subr.bf16.mxu0 0
    %1874 = vmatpush1.bf16.msra.mxu0 %v1770
    %1875 = vmatprep.mubr.bf16.mxu0 %v1539
    %1876 = vmatmul.mubr.bf16.gmra.mrb[0].mxu0 %v1538
    %v1877 = vpop.f32.mrb[0].mxu0
    %v1878 = vadd.f32 %v1838, %v1877
    %v1879 = vpop.f32.mrb[0].mxu0
    %v1880 = vpop.f32.mrb[0].mxu0
    %v1881 = vpop.f32.mrb[0].mxu0
    %1882 = vdwg.mxu0
    %1883 = vst [vmem:[%s7] sm:$0x3] %v1878
    // Predicated region
    $region42: #{feature_predictor_forward.1} parent=1 // pred_check
      _
    $region43: #{feature_predictor_forward.1} parent=1 // pred_check_branch
      %1885 = sbr.rel (0) target = $region45
    $region44: #{feature_predictor_forward.1} parent=1 // pred_region
      _
    $region45: #{feature_predictor_forward.1} parent=1 // pred_fallthru
      _
    // Predicated region
    $region46: #{feature_predictor_forward.1} parent=1 // pred_check
      _
    $region47: #{feature_predictor_forward.1} parent=1 // pred_check_branch
      %1887 = sbr.rel (0) target = $region49
    $region48: #{feature_predictor_forward.1} parent=1 // pred_region
      _
    $region49: #{feature_predictor_forward.1} parent=1 // pred_fallthru
      _
    %1888 = vsyncpa [#allocation3], 1
    %1889 = vsyncpa [#allocation5], 1

</llo_original>
